<compile_context>
chip_gen: v7x
topology: tpu7x:2x2x1
jax: 0.10.0
libtpu: 0.0.40
codegen_flags: <defaults>
</compile_context>

<pallas_src>
import math
from functools import partial

import numpy as np
import jax
import jax.numpy as jnp
from jax.experimental import pallas as pl
from jax.experimental.pallas import tpu as pltpu


NC_PAD = 128  # classifier output padded to a full 128-lane vreg (lane-dense stores)


# ----------------------------- Pallas kernel -----------------------------

def _erf_f32(x):
    # float32 polynomial erf (Abramowitz & Stegun 7.1.26, |err| < 1.5e-7) so the
    # exact (erf-based) torch.nn.GELU can be evaluated in-kernel with exp only.
    a1, a2, a3, a4, a5 = 0.254829592, -0.284496736, 1.421413741, -1.453152027, 1.061405429
    p = 0.3275911
    s = jnp.where(x >= 0.0, 1.0, -1.0)
    ax = jnp.abs(x)
    t = pl.reciprocal(1.0 + p * ax, approx=True)          # divide -> EUP
    poly = ((((a5 * t + a4) * t + a3) * t + a2) * t + a1) * t
    return s * (1.0 - poly * jnp.exp(-ax * ax))


def _weed_kernel(x_ref, Wred_ref, Wqkv_ref, Wom_ref, Wc_ref, bias_ref, out_ref,
                 *, B, Ppad, L, E, H, use_bf16):
    """Whole batch in one invocation.

    Row layout of x_ref: [B*Ppad patch rows ; B*L unfolded-block rows].
    Reducer / LN / QKV / out-proj / MLP / classifier are row-independent, so the
    batch is folded into the row dim.  Attention separates per batch element
    (static loop) with all heads batched into a single einsum pair + softmax.
    """
    mmdt = jnp.bfloat16 if use_bf16 else jnp.float32

    def mm(a, w):
        return jnp.dot(a.astype(w.dtype), w, preferred_element_type=jnp.float32)

    # packed bias rows: 0=b_red 1=ln_gamma 2=ln_beta 3=b_qkv 4=b_o 5=b_m 6=b_cls
    b_red = bias_ref[0:1, :E]
    gamma = bias_ref[1:2, :E]
    beta = bias_ref[2:3, :E]
    b_qkv = bias_ref[3:4, :3 * E]
    b_o = bias_ref[4:5, :E]
    b_m = bias_ref[5:6, :E]
    b_c = bias_ref[6:7, :Wc_ref.shape[1]]

    def layer_norm(x):
        mu = jnp.mean(x, axis=-1, keepdims=True)
        var = jnp.mean(jnp.square(x - mu), axis=-1, keepdims=True)
        return (x - mu) * jax.lax.rsqrt(var + 1e-5) * gamma + beta

    # --- shared Patch2vec linear reducer + LayerNorm over all rows -------------
    x = x_ref[...].astype(jnp.float32)                            # [R, fvec]
    pe = layer_norm(mm(x, Wred_ref[...]) + b_red)                 # [R, E]

    # --- fused QKV projection (q kept for patch rows, k/v for block rows) ------
    qkv = mm(pe, Wqkv_ref[...]) + b_qkv                           # [R, 3E]
    nq = B * Ppad
    q = qkv[:nq, 0:E]                                             # [B*Ppad, E]
    k = qkv[nq:, E:2 * E]                                         # [B*L,   E]
    v = qkv[nq:, 2 * E:3 * E]                                     # [B*L,   E]

    # --- multi-head attention: per batch element, all heads in one contraction -
    Dh = E // H
    scale = 1.0 / math.sqrt(Dh)
    attn_rows = []
    for b in range(B):                                            # B static & small
        qb = q[b * Ppad:(b + 1) * Ppad, :].reshape(Ppad, H, Dh).transpose(1, 0, 2)
        kb = k[b * L:(b + 1) * L, :].reshape(L, H, Dh).transpose(1, 0, 2)
        vb = v[b * L:(b + 1) * L, :].reshape(L, H, Dh).transpose(1, 0, 2)
        s = jnp.einsum('hpd,hld->hpl', qb.astype(mmdt), kb.astype(mmdt),
                       preferred_element_type=jnp.float32) * scale      # [H,Ppad,L]
        s = s - jnp.max(s, axis=-1, keepdims=True)
        pexp = jnp.exp(s)
        pexp = pexp * pl.reciprocal(jnp.sum(pexp, axis=-1, keepdims=True),
                                    approx=True)
        ob = jnp.einsum('hpl,hld->hpd', pexp.astype(mmdt), vb.astype(mmdt),
                        preferred_element_type=jnp.float32)              # [H,Ppad,Dh]
        attn_rows.append(ob.transpose(1, 0, 2).reshape(Ppad, E))
    attn_cat = jnp.concatenate(attn_rows, axis=0)                 # [B*Ppad, E] (regs)

    # --- out projection + residual LayerNorm -----------------------------------
    Wom = Wom_ref[...]                                            # [E, 2E] = Wo|Wm
    attn = mm(attn_cat, Wom[:, 0:E]) + b_o
    res = layer_norm(attn + pe[:nq, :])

    # --- MLP: Linear + exact-erf GELU (Dropout(0) == identity), residual add ---
    hmid = mm(res, Wom[:, E:2 * E]) + b_m
    hmid = 0.5 * hmid * (1.0 + _erf_f32(hmid * (1.0 / math.sqrt(2.0))))
    y = hmid + res

    # --- classifier, lane-padded to NC_PAD (sliced outside the kernel) ---------
    out_ref[...] = (mm(y, Wc_ref[...]) + b_c).astype(out_ref.dtype)


def _fused_weed_call(x_all, params, *, B, Ppad, L, E, H):
    """Single pallas_call, grid=(), everything resident in VMEM (<1 MiB)."""
    ncp = params["Wc_pad"].shape[1]
    use_bf16 = params["Wqkv"].dtype == jnp.bfloat16
    kernel = partial(_weed_kernel, B=B, Ppad=Ppad, L=L, E=E, H=H, use_bf16=use_bf16)
    vmem = lambda: pl.BlockSpec(memory_space=pltpu.MemorySpace.VMEM)
    return pl.pallas_call(
        kernel,
        out_shape=jax.ShapeDtypeStruct((B * Ppad, ncp), jnp.float32),
        in_specs=[vmem() for _ in range(6)],
        out_specs=vmem(),
    )(x_all, params["W_red"], params["Wqkv"], params["W_om"], params["Wc_pad"],
      params["biases"])


# ---------------------- jitted device-side preprocessing ----------------------

def _pool_reduce(x, cd, rs):
    # AdaptiveAvgPool3d((cd, rs, rs)) for exactly-divisible shapes + flatten.
    # TODO(synk): general (non-divisible) adaptive bin rule not implemented.
    B, P, C, h, w = x.shape
    x = x.reshape(B, P, cd, C // cd, rs, h // rs, rs, w // rs)
    return x.mean(axis=(3, 5, 7)).reshape(B, P, cd * rs * rs)


def _unfold_blocks(features, k, stride):
    # F.unfold(kernel=(k,k), stride) + rearrange 'b (c h w) l -> b l c h w'.
    B, C, H, W = features.shape
    if stride == k and H % k == 0 and W % k == 0:
        nH, nW = H // k, W // k
        x = features.reshape(B, C, nH, k, nW, k)
        x = jnp.transpose(x, (0, 2, 4, 1, 3, 5))                  # [B,nH,nW,C,k,k]
        return x.reshape(B, nH * nW, C, k, k)
    # General fallback (rare path).  TODO(synk): lax.conv_general_dilated_patches.
    rows = []
    for hi in range(0, H - k + 1, stride):
        for wi in range(0, W - k + 1, stride):
            rows.append(features[:, :, hi:hi + k, wi:wi + k])
    return jnp.stack(rows, axis=1)


def _device_forward(params, features, patches, *, cd, rs, patch_dim, stride,
                    num_heads, n_out):
    """Everything device-side for one forward: pool, unfold, fused kernel, slice."""
    B, Ppad = patches.shape[0], patches.shape[1]
    E = params["W_red"].shape[1]

    xp = _pool_reduce(patches.astype(jnp.float32), cd, rs)        # [B, Ppad, fvec]
    blocks = _unfold_blocks(features.astype(jnp.float32), patch_dim, stride)
    xb = _pool_reduce(blocks, cd, rs)                             # [B, L, fvec]
    L = xb.shape[1]
    fvec = xp.shape[2]

    # fold batch into rows: [all patch rows ; all block rows]
    x_all = jnp.concatenate([xp.reshape(B * Ppad, fvec),
                             xb.reshape(B * L, fvec)], axis=0)

    out = _fused_weed_call(x_all, params, B=B, Ppad=Ppad, L=L, E=E, H=num_heads)
    return out.reshape(B, Ppad, NC_PAD)[:, :, :n_out]             # [B, Ppad, nc-1]


# ------------------------- host-side structural glue -------------------------

def _ccl_min_propagation(fg):
    # Vectorized 8-connected labeling via min-label propagation (NumPy fallback).
    H, W = fg.shape
    big = np.iinfo(np.int64).max
    labels = np.where(fg, np.arange(1, H * W + 1, dtype=np.int64).reshape(H, W), 0)
    while True:
        p = np.full((H + 2, W + 2), big, dtype=np.int64)
        p[1:-1, 1:-1] = np.where(fg, labels, big)
        neigh = np.minimum.reduce([p[i:i + H, j:j + W] for i in range(3) for j in range(3)])
        new = np.where(fg, np.minimum(labels, neigh), 0)
        if np.array_equal(new, labels):
            break
        labels = new
    out = np.zeros((H, W), dtype=np.int32)
    if fg.any():
        for idx, u in enumerate(np.unique(labels[fg]), start=1):
            out[labels == u] = idx
    return out


def connected_components_labeling(sample):
    # TODO(synk): host-side replacement of the external CUDA
    # `connected_components_labeling` (8-connectivity, nonzero = foreground).
    fg = np.asarray(sample) != 0
    try:
        from scipy import ndimage
        labels, _ = ndimage.label(fg, structure=np.ones((3, 3), dtype=bool))
        return labels.astype(np.int32)
    except Exception:
        return _ccl_min_propagation(fg)


def adaptive_avg_pool2d_np(x, out_h, out_w):
    # PyTorch AdaptiveAvgPool2d bin rule, vectorized with an integral image.
    C, H, W = x.shape
    cs = np.zeros((C, H + 1, W + 1), dtype=np.float64)
    cs[:, 1:, 1:] = np.cumsum(np.cumsum(x.astype(np.float64), axis=1), axis=2)
    ih = np.arange(out_h)
    iw = np.arange(out_w)
    h0 = (ih * H) // out_h
    h1 = -(-((ih + 1) * H) // out_h)
    w0 = (iw * W) // out_w
    w1 = -(-((iw + 1) * W) // out_w)
    sums = (cs[:, h1[:, None], w1[None, :]] - cs[:, h0[:, None], w1[None, :]]
            - cs[:, h1[:, None], w0[None, :]] + cs[:, h0[:, None], w0[None, :]])
    area = ((h1 - h0)[:, None] * (w1 - w0)[None, :]).astype(np.float64)
    return (sums / area).astype(np.float32)


def extract_patch(x, pos, mask, patch_dim):
    # PatchExtractor.forward: bounding-box crop of component `pos`, adaptive pool.
    if pos == -1:
        return np.zeros((x.shape[0], patch_dim, patch_dim), dtype=np.float32)
    xs, ys = np.where(mask == pos)
    x0, x1 = xs.min(), xs.max() + 1
    y0, y1 = ys.min(), ys.max() + 1
    return adaptive_avg_pool2d_np(x[:, x0:x1, y0:y1], patch_dim, patch_dim)


def reclassify(probs_i, patch_logits, mask, positions):
    # WeedLayer._reclassify on one batch element (in-place on NumPy copy).
    if len(positions) == 0:
        return probs_i
    patch_logits = patch_logits[:len(positions)]
    for logit, position in zip(patch_logits, positions):
        mp = mask == position
        orig_mean = probs_i[:, mp].mean(axis=1) + 1e-6
        probs_i[0][mp] = orig_mean[0] / orig_mean[1:3].mean() * logit.mean()
        probs_i[1][mp] = logit[0]
        probs_i[2][mp] = logit[1]
    return probs_i


def _bucket_rows(n):
    # Bucket Ppad to {8, 16, 32, 64, ...} so varying component counts do not
    # trigger full jit/Pallas recompiles (recompiles dominate sub-µs kernels).
    return max(8, 1 << (int(n) - 1).bit_length())


def _default_use_bf16():
    # bf16 MXU operands on every TPU generation (v5e MXU is bf16-native too);
    # accumulation stays f32 via preferred_element_type.
    try:
        return jax.devices()[0].platform == "tpu"
    except Exception:
        return False


# ------------------------------- WeedLayer -------------------------------

class WeedLayerPallas:
    """JAX/Pallas port of WeedLayer (inference, deterministic synthetic params)."""

    def __init__(self, in_channels, embedding_dim, patch_dim, emb_patch_div,
                 num_heads, num_classes, key, use_bf16_matmul=None):
        assert embedding_dim % num_heads == 0, "embedding_dim must divide by num_heads"
        self.in_channels = in_channels
        self.embedding_dim = embedding_dim
        self.patch_dim = patch_dim
        self.emb_patch_div = emb_patch_div
        self.num_heads = num_heads
        self.num_classes = num_classes
        self.use_bf16 = _default_use_bf16() if use_bf16_matmul is None else use_bf16_matmul

        self.result_size = patch_dim // emb_patch_div
        self.channel_depth = in_channels // 4
        fvec = self.channel_depth * self.result_size * self.result_size
        E = embedding_dim
        wdt = jnp.bfloat16 if self.use_bf16 else jnp.float32   # pre-cast weights once

        ks = jax.random.split(key, 10)

        def w(k, shape):
            return 0.02 * jax.random.normal(k, shape, dtype=jnp.float32)

        Wo = w(ks[2], (E, E))
        Wm = w(ks[3], (E, E))
        Wc = w(ks[4], (E, num_classes - 1))
        Wc_pad = jnp.zeros((E, NC_PAD), jnp.float32).at[:, :num_classes - 1].set(Wc)

        # all bias / LayerNorm rows packed into ONE lane-dense array (1 DMA)
        bias_w = max(3 * E, NC_PAD)
        bias_w = ((bias_w + 127) // 128) * 128
        biases = np.zeros((8, bias_w), np.float32)
        biases[0, :E] = np.asarray(w(ks[5], (E,)))                       # b_red
        biases[1, :E] = 1.0                                              # ln gamma
        biases[2, :E] = 0.0                                              # ln beta
        biases[3, :3 * E] = np.asarray(w(ks[6], (3 * E,)))               # b_qkv
        biases[4, :E] = np.asarray(w(ks[7], (E,)))                       # b_o
        biases[5, :E] = np.asarray(w(ks[8], (E,)))                       # b_m
        biases[6, :num_classes - 1] = np.asarray(w(ks[9], (num_classes - 1,)))  # b_cls

        self.params = dict(
            # Patch2vec.linear_reducer (shared between real patches and blocks)
            W_red=w(ks[0], (fvec, E)).astype(wdt),
            # nn.MultiheadAttention fused in_proj (q|k|v)
            Wqkv=w(ks[1], (E, 3 * E)).astype(wdt),
            # out_proj and MLP Linear fused into one weight slab
            W_om=jnp.concatenate([Wo, Wm], axis=1).astype(wdt),
            # classifier Linear(E, num_classes - 1), lane-padded to NC_PAD
            Wc_pad=Wc_pad.astype(wdt),
            # packed biases + LayerNorm affine (f32, added post-accumulation)
            biases=jnp.asarray(biases),
        )

        # One jitted device function: pooling + unfold + fused Pallas kernel + slice.
        self._fwd = jax.jit(partial(
            _device_forward,
            cd=self.channel_depth, rs=self.result_size, patch_dim=self.patch_dim,
            stride=16, num_heads=self.num_heads, n_out=self.num_classes - 1))

    # ---- WeedLayer.forward ----
    def forward(self, features, probs):
        feats = np.asarray(features, dtype=np.float32)
        probs = np.array(probs, dtype=np.float32)          # copy; updated in place
        B, C, H, W = feats.shape

        samples = probs.argmax(axis=1).astype(np.uint8)
        masks = [connected_components_labeling(s) for s in samples]
        positions = [np.unique(m) for m in masks]
        positions = [p[p != 0] for p in positions]
        filled_positions = [np.array([-1]) if len(p) == 0 else p for p in positions]

        if sum(len(p) for p in positions) == 0:
            return probs

        # ragged bbox crops + adaptive pool (host), padded to a bucketed Ppad
        patch_list = []
        for feat, fpos, mask in zip(feats, filled_positions, masks):
            pp = np.stack([extract_patch(feat, int(pos), mask, self.patch_dim)
                           for pos in fpos], axis=0)                 # [p, C, pd, pd]
            patch_list.append(pp)
        max_len = max(p.shape[0] for p in patch_list)
        Ppad = _bucket_rows(max_len)                                 # {8,16,32,...}
        patches = np.zeros((B, Ppad, C, self.patch_dim, self.patch_dim), np.float32)
        for i, pp in enumerate(patch_list):
            patches[i, :pp.shape[0]] = pp

        # single device dispatch (pool + unfold + fused Pallas kernel + slice)
        outs = self._fwd(self.params, jnp.asarray(feats), jnp.asarray(patches))
        outs = np.asarray(jax.block_until_ready(outs))               # [B, Ppad, nc-1]

        for i in range(B):
            probs[i] = reclassify(probs[i], outs[i], masks[i], positions[i])
        return probs


# ----------------------------------- main -----------------------------------

if __name__ == "__main__":
    B, C, H, W = 2, 16, 32, 32
    embedding_dim, patch_dim, emb_patch_div = 32, 16, 4
    num_heads, num_classes = 4, 3

    key = jax.random.PRNGKey(0)
    k_feat, k_prob, k_param = jax.random.split(key, 3)

    features = jax.random.normal(k_feat, (B, C, H, W), dtype=jnp.float32)

    # probs: class 0 dominates the background; plant class-1 and class-2 blobs so
    # connected-components finds real regions and the Pallas path actually runs.
    probs = 0.1 * jax.random.normal(k_prob, (B, num_classes, H, W), dtype=jnp.float32)
    probs = probs.at[:, 0, :, :].add(3.0)
    probs = probs.at[:, 1, 4:12, 4:12].add(6.0)
    probs = probs.at[:, 2, 20:28, 18:26].add(6.0)

    layer = WeedLayerPallas(C, embedding_dim, patch_dim, emb_patch_div,
                            num_heads, num_classes, k_param)
    out = layer.forward(features, probs)
    out = jax.block_until_ready(jnp.asarray(out))
    assert out.shape == (B, num_classes, H, W)
    assert bool(jnp.all(jnp.isfinite(out)))
    print("KERNEL_OK")
</pallas_src>

<mosaic_0001>
module attributes {stable_mosaic.version = 11 : i64} {
  func.func @_weed_kernel(%arg0: memref<24x64xf32, #tpu.memory_space<vmem>>, %arg1: memref<64x32xf32, #tpu.memory_space<vmem>>, %arg2: memref<32x96xf32, #tpu.memory_space<vmem>>, %arg3: memref<32x64xf32, #tpu.memory_space<vmem>>, %arg4: memref<32x128xf32, #tpu.memory_space<vmem>>, %arg5: memref<8x128xf32, #tpu.memory_space<vmem>>, %arg6: memref<16x128xf32, #tpu.memory_space<vmem>>) attributes {dimension_semantics = [], scalar_prefetch = 0 : i64, scratch_operands = 0 : i64, tpu.core_type = #tpu.core_type<tc>} {
    %c0 = arith.constant 0 : index
    %c0_0 = arith.constant 0 : index
    %0 = vector.load %arg5[%c0, %c0_0] : memref<8x128xf32, #tpu.memory_space<vmem>>, vector<1x32xf32>
    %c1 = arith.constant 1 : index
    %c0_1 = arith.constant 0 : index
    %1 = vector.load %arg5[%c1, %c0_1] : memref<8x128xf32, #tpu.memory_space<vmem>>, vector<1x32xf32>
    %c2 = arith.constant 2 : index
    %c0_2 = arith.constant 0 : index
    %2 = vector.load %arg5[%c2, %c0_2] : memref<8x128xf32, #tpu.memory_space<vmem>>, vector<1x32xf32>
    %c3 = arith.constant 3 : index
    %c0_3 = arith.constant 0 : index
    %3 = vector.load %arg5[%c3, %c0_3] : memref<8x128xf32, #tpu.memory_space<vmem>>, vector<1x96xf32>
    %c4 = arith.constant 4 : index
    %c0_4 = arith.constant 0 : index
    %4 = vector.load %arg5[%c4, %c0_4] : memref<8x128xf32, #tpu.memory_space<vmem>>, vector<1x32xf32>
    %c5 = arith.constant 5 : index
    %c0_5 = arith.constant 0 : index
    %5 = vector.load %arg5[%c5, %c0_5] : memref<8x128xf32, #tpu.memory_space<vmem>>, vector<1x32xf32>
    %c6 = arith.constant 6 : index
    %c0_6 = arith.constant 0 : index
    %6 = vector.load %arg5[%c6, %c0_6] : memref<8x128xf32, #tpu.memory_space<vmem>>, vector<1x128xf32>
    %c0_7 = arith.constant 0 : index
    %c0_8 = arith.constant 0 : index
    %7 = vector.load %arg0[%c0_7, %c0_8] : memref<24x64xf32, #tpu.memory_space<vmem>>, vector<24x64xf32>
    %c0_9 = arith.constant 0 : index
    %c0_10 = arith.constant 0 : index
    %8 = vector.load %arg1[%c0_9, %c0_10] : memref<64x32xf32, #tpu.memory_space<vmem>>, vector<64x32xf32>
    %cst = arith.constant dense<0.000000e+00> : vector<24x32xf32>
    %9 = tpu.matmul %7, %8, %cst {dimension_numbers = #tpu.dot_dimension_numbers<[1], [0], [0], [1], [0, 0, 1, 1], [], []>} : vector<24x64xf32>, vector<64x32xf32>, vector<24x32xf32> -> vector<24x32xf32>
    %10 = vector.broadcast %0 : vector<1x32xf32> to vector<24x32xf32>
    %11 = arith.addf %9, %10 : vector<24x32xf32>
    %cst_11 = arith.constant dense<0.000000e+00> : vector<24xf32>
    %12 = vector.multi_reduction <add>, %11, %cst_11 [1] : vector<24x32xf32> to vector<24xf32>
    %13 = vector.shape_cast %12 : vector<24xf32> to vector<24x1xf32>
    %cst_12 = arith.constant 3.200000e+01 : f32
    %14 = vector.broadcast %cst_12 : f32 to vector<24x1xf32>
    %15 = arith.divf %13, %14 : vector<24x1xf32>
    %16 = vector.broadcast %15 : vector<24x1xf32> to vector<24x32xf32>
    %17 = arith.subf %11, %16 : vector<24x32xf32>
    %18 = arith.mulf %17, %17 : vector<24x32xf32>
    %cst_13 = arith.constant dense<0.000000e+00> : vector<24xf32>
    %19 = vector.multi_reduction <add>, %18, %cst_13 [1] : vector<24x32xf32> to vector<24xf32>
    %20 = vector.shape_cast %19 : vector<24xf32> to vector<24x1xf32>
    %cst_14 = arith.constant 3.200000e+01 : f32
    %21 = vector.broadcast %cst_14 : f32 to vector<24x1xf32>
    %22 = arith.divf %20, %21 : vector<24x1xf32>
    %23 = vector.broadcast %15 : vector<24x1xf32> to vector<24x32xf32>
    %24 = arith.subf %11, %23 : vector<24x32xf32>
    %cst_15 = arith.constant 9.99999974E-6 : f32
    %25 = vector.broadcast %cst_15 : f32 to vector<24x1xf32>
    %26 = arith.addf %22, %25 : vector<24x1xf32>
    %27 = math.rsqrt %26 : vector<24x1xf32>
    %28 = vector.broadcast %27 : vector<24x1xf32> to vector<24x32xf32>
    %29 = arith.mulf %24, %28 : vector<24x32xf32>
    %30 = vector.broadcast %1 : vector<1x32xf32> to vector<24x32xf32>
    %31 = arith.mulf %29, %30 : vector<24x32xf32>
    %32 = vector.broadcast %2 : vector<1x32xf32> to vector<24x32xf32>
    %33 = arith.addf %31, %32 : vector<24x32xf32>
    %c0_16 = arith.constant 0 : index
    %c0_17 = arith.constant 0 : index
    %34 = vector.load %arg2[%c0_16, %c0_17] : memref<32x96xf32, #tpu.memory_space<vmem>>, vector<32x96xf32>
    %cst_18 = arith.constant dense<0.000000e+00> : vector<24x96xf32>
    %35 = tpu.matmul %33, %34, %cst_18 {dimension_numbers = #tpu.dot_dimension_numbers<[1], [0], [0], [1], [0, 0, 1, 1], [], []>} : vector<24x32xf32>, vector<32x96xf32>, vector<24x96xf32> -> vector<24x96xf32>
    %36 = vector.broadcast %3 : vector<1x96xf32> to vector<24x96xf32>
    %37 = arith.addf %35, %36 : vector<24x96xf32>
    %38 = vector.extract_strided_slice %37 {offsets = [0, 0], sizes = [16, 32], strides = [1, 1]} : vector<24x96xf32> to vector<16x32xf32>
    %39 = vector.extract_strided_slice %37 {offsets = [16, 32], sizes = [8, 32], strides = [1, 1]} : vector<24x96xf32> to vector<8x32xf32>
    %40 = vector.extract_strided_slice %37 {offsets = [16, 64], sizes = [8, 32], strides = [1, 1]} : vector<24x96xf32> to vector<8x32xf32>
    %41 = vector.extract_strided_slice %38 {offsets = [0, 0], sizes = [8, 32], strides = [1, 1]} : vector<16x32xf32> to vector<8x32xf32>
    %42 = vector.shape_cast %41 : vector<8x32xf32> to vector<8x4x8xf32>
    %43 = tpu.transpose %42, [1, 0, 2] : vector<8x4x8xf32> -> vector<4x8x8xf32>
    %44 = vector.extract_strided_slice %39 {offsets = [0, 0], sizes = [4, 32], strides = [1, 1]} : vector<8x32xf32> to vector<4x32xf32>
    %45 = vector.shape_cast %44 : vector<4x32xf32> to vector<4x4x8xf32>
    %46 = tpu.transpose %45, [1, 0, 2] : vector<4x4x8xf32> -> vector<4x4x8xf32>
    %47 = vector.extract_strided_slice %40 {offsets = [0, 0], sizes = [4, 32], strides = [1, 1]} : vector<8x32xf32> to vector<4x32xf32>
    %48 = vector.shape_cast %47 : vector<4x32xf32> to vector<4x4x8xf32>
    %49 = tpu.transpose %48, [1, 0, 2] : vector<4x4x8xf32> -> vector<4x4x8xf32>
    "tpu.trace_start"() <{level = 10 : i32, message = "hpd,hld->hpl"}> : () -> ()
    %cst_19 = arith.constant dense<0.000000e+00> : vector<4x8x4xf32>
    %50 = tpu.matmul %43, %46, %cst_19 {dimension_numbers = #tpu.dot_dimension_numbers<[2], [2], [1], [1], [0, 0, 0, 1, 1, 1], [0], [0]>} : vector<4x8x8xf32>, vector<4x4x8xf32>, vector<4x8x4xf32> -> vector<4x8x4xf32>
    "tpu.trace_stop"() : () -> ()
    %cst_20 = arith.constant 0.353553385 : f32
    %51 = vector.broadcast %cst_20 : f32 to vector<4x8x4xf32>
    %52 = arith.mulf %50, %51 : vector<4x8x4xf32>
    %cst_21 = arith.constant dense<0xFF800000> : vector<4x8xf32>
    %53 = vector.multi_reduction <maximumf>, %52, %cst_21 [2] : vector<4x8x4xf32> to vector<4x8xf32>
    %54 = vector.shape_cast %53 : vector<4x8xf32> to vector<4x8x1xf32>
    %55 = vector.broadcast %54 : vector<4x8x1xf32> to vector<4x8x4xf32>
    %56 = arith.subf %52, %55 : vector<4x8x4xf32>
    %57 = math.exp %56 : vector<4x8x4xf32>
    %cst_22 = arith.constant dense<0.000000e+00> : vector<4x8xf32>
    %58 = vector.multi_reduction <add>, %57, %cst_22 [2] : vector<4x8x4xf32> to vector<4x8xf32>
    %59 = vector.shape_cast %58 : vector<4x8xf32> to vector<4x8x1xf32>
    %60 = tpu.reciprocal %59 {approx = true} : vector<4x8x1xf32> -> vector<4x8x1xf32>
    %61 = vector.broadcast %60 : vector<4x8x1xf32> to vector<4x8x4xf32>
    %62 = arith.mulf %57, %61 : vector<4x8x4xf32>
    "tpu.trace_start"() <{level = 10 : i32, message = "hpl,hld->hpd"}> : () -> ()
    %cst_23 = arith.constant dense<0.000000e+00> : vector<4x8x8xf32>
    %63 = tpu.matmul %62, %49, %cst_23 {dimension_numbers = #tpu.dot_dimension_numbers<[2], [1], [1], [2], [0, 0, 0, 1, 1, 2], [0], [0]>} : vector<4x8x4xf32>, vector<4x4x8xf32>, vector<4x8x8xf32> -> vector<4x8x8xf32>
    "tpu.trace_stop"() : () -> ()
    %64 = tpu.transpose %63, [1, 0, 2] : vector<4x8x8xf32> -> vector<8x4x8xf32>
    %65 = vector.shape_cast %64 : vector<8x4x8xf32> to vector<8x32xf32>
    %66 = vector.extract_strided_slice %38 {offsets = [8, 0], sizes = [8, 32], strides = [1, 1]} : vector<16x32xf32> to vector<8x32xf32>
    %67 = vector.shape_cast %66 : vector<8x32xf32> to vector<8x4x8xf32>
    %68 = tpu.transpose %67, [1, 0, 2] : vector<8x4x8xf32> -> vector<4x8x8xf32>
    %69 = vector.extract_strided_slice %39 {offsets = [4, 0], sizes = [4, 32], strides = [1, 1]} : vector<8x32xf32> to vector<4x32xf32>
    %70 = vector.shape_cast %69 : vector<4x32xf32> to vector<4x4x8xf32>
    %71 = tpu.transpose %70, [1, 0, 2] : vector<4x4x8xf32> -> vector<4x4x8xf32>
    %72 = vector.extract_strided_slice %40 {offsets = [4, 0], sizes = [4, 32], strides = [1, 1]} : vector<8x32xf32> to vector<4x32xf32>
    %73 = vector.shape_cast %72 : vector<4x32xf32> to vector<4x4x8xf32>
    %74 = tpu.transpose %73, [1, 0, 2] : vector<4x4x8xf32> -> vector<4x4x8xf32>
    "tpu.trace_start"() <{level = 10 : i32, message = "hpd,hld->hpl"}> : () -> ()
    %cst_24 = arith.constant dense<0.000000e+00> : vector<4x8x4xf32>
    %75 = tpu.matmul %68, %71, %cst_24 {dimension_numbers = #tpu.dot_dimension_numbers<[2], [2], [1], [1], [0, 0, 0, 1, 1, 1], [0], [0]>} : vector<4x8x8xf32>, vector<4x4x8xf32>, vector<4x8x4xf32> -> vector<4x8x4xf32>
    "tpu.trace_stop"() : () -> ()
    %cst_25 = arith.constant 0.353553385 : f32
    %76 = vector.broadcast %cst_25 : f32 to vector<4x8x4xf32>
    %77 = arith.mulf %75, %76 : vector<4x8x4xf32>
    %cst_26 = arith.constant dense<0xFF800000> : vector<4x8xf32>
    %78 = vector.multi_reduction <maximumf>, %77, %cst_26 [2] : vector<4x8x4xf32> to vector<4x8xf32>
    %79 = vector.shape_cast %78 : vector<4x8xf32> to vector<4x8x1xf32>
    %80 = vector.broadcast %79 : vector<4x8x1xf32> to vector<4x8x4xf32>
    %81 = arith.subf %77, %80 : vector<4x8x4xf32>
    %82 = math.exp %81 : vector<4x8x4xf32>
    %cst_27 = arith.constant dense<0.000000e+00> : vector<4x8xf32>
    %83 = vector.multi_reduction <add>, %82, %cst_27 [2] : vector<4x8x4xf32> to vector<4x8xf32>
    %84 = vector.shape_cast %83 : vector<4x8xf32> to vector<4x8x1xf32>
    %85 = tpu.reciprocal %84 {approx = true} : vector<4x8x1xf32> -> vector<4x8x1xf32>
    %86 = vector.broadcast %85 : vector<4x8x1xf32> to vector<4x8x4xf32>
    %87 = arith.mulf %82, %86 : vector<4x8x4xf32>
    "tpu.trace_start"() <{level = 10 : i32, message = "hpl,hld->hpd"}> : () -> ()
    %cst_28 = arith.constant dense<0.000000e+00> : vector<4x8x8xf32>
    %88 = tpu.matmul %87, %74, %cst_28 {dimension_numbers = #tpu.dot_dimension_numbers<[2], [1], [1], [2], [0, 0, 0, 1, 1, 2], [0], [0]>} : vector<4x8x4xf32>, vector<4x4x8xf32>, vector<4x8x8xf32> -> vector<4x8x8xf32>
    "tpu.trace_stop"() : () -> ()
    %89 = tpu.transpose %88, [1, 0, 2] : vector<4x8x8xf32> -> vector<8x4x8xf32>
    %90 = vector.shape_cast %89 : vector<8x4x8xf32> to vector<8x32xf32>
    %91 = tpu.concatenate %65, %90 in 0 : vector<8x32xf32>, vector<8x32xf32> -> vector<16x32xf32>
    %c0_29 = arith.constant 0 : index
    %c0_30 = arith.constant 0 : index
    %92 = vector.load %arg3[%c0_29, %c0_30] : memref<32x64xf32, #tpu.memory_space<vmem>>, vector<32x64xf32>
    %93 = vector.extract_strided_slice %92 {offsets = [0, 0], sizes = [32, 32], strides = [1, 1]} : vector<32x64xf32> to vector<32x32xf32>
    %cst_31 = arith.constant dense<0.000000e+00> : vector<16x32xf32>
    %94 = tpu.matmul %91, %93, %cst_31 {dimension_numbers = #tpu.dot_dimension_numbers<[1], [0], [0], [1], [0, 0, 1, 1], [], []>} : vector<16x32xf32>, vector<32x32xf32>, vector<16x32xf32> -> vector<16x32xf32>
    %95 = vector.broadcast %4 : vector<1x32xf32> to vector<16x32xf32>
    %96 = arith.addf %94, %95 : vector<16x32xf32>
    %97 = vector.extract_strided_slice %33 {offsets = [0, 0], sizes = [16, 32], strides = [1, 1]} : vector<24x32xf32> to vector<16x32xf32>
    %98 = arith.addf %96, %97 : vector<16x32xf32>
    %cst_32 = arith.constant dense<0.000000e+00> : vector<16xf32>
    %99 = vector.multi_reduction <add>, %98, %cst_32 [1] : vector<16x32xf32> to vector<16xf32>
    %100 = vector.shape_cast %99 : vector<16xf32> to vector<16x1xf32>
    %cst_33 = arith.constant 3.200000e+01 : f32
    %101 = vector.broadcast %cst_33 : f32 to vector<16x1xf32>
    %102 = arith.divf %100, %101 : vector<16x1xf32>
    %103 = vector.broadcast %102 : vector<16x1xf32> to vector<16x32xf32>
    %104 = arith.subf %98, %103 : vector<16x32xf32>
    %105 = arith.mulf %104, %104 : vector<16x32xf32>
    %cst_34 = arith.constant dense<0.000000e+00> : vector<16xf32>
    %106 = vector.multi_reduction <add>, %105, %cst_34 [1] : vector<16x32xf32> to vector<16xf32>
    %107 = vector.shape_cast %106 : vector<16xf32> to vector<16x1xf32>
    %cst_35 = arith.constant 3.200000e+01 : f32
    %108 = vector.broadcast %cst_35 : f32 to vector<16x1xf32>
    %109 = arith.divf %107, %108 : vector<16x1xf32>
    %110 = vector.broadcast %102 : vector<16x1xf32> to vector<16x32xf32>
    %111 = arith.subf %98, %110 : vector<16x32xf32>
    %cst_36 = arith.constant 9.99999974E-6 : f32
    %112 = vector.broadcast %cst_36 : f32 to vector<16x1xf32>
    %113 = arith.addf %109, %112 : vector<16x1xf32>
    %114 = math.rsqrt %113 : vector<16x1xf32>
    %115 = vector.broadcast %114 : vector<16x1xf32> to vector<16x32xf32>
    %116 = arith.mulf %111, %115 : vector<16x32xf32>
    %117 = vector.broadcast %1 : vector<1x32xf32> to vector<16x32xf32>
    %118 = arith.mulf %116, %117 : vector<16x32xf32>
    %119 = vector.broadcast %2 : vector<1x32xf32> to vector<16x32xf32>
    %120 = arith.addf %118, %119 : vector<16x32xf32>
    %121 = vector.extract_strided_slice %92 {offsets = [0, 32], sizes = [32, 32], strides = [1, 1]} : vector<32x64xf32> to vector<32x32xf32>
    %cst_37 = arith.constant dense<0.000000e+00> : vector<16x32xf32>
    %122 = tpu.matmul %120, %121, %cst_37 {dimension_numbers = #tpu.dot_dimension_numbers<[1], [0], [0], [1], [0, 0, 1, 1], [], []>} : vector<16x32xf32>, vector<32x32xf32>, vector<16x32xf32> -> vector<16x32xf32>
    %123 = vector.broadcast %5 : vector<1x32xf32> to vector<16x32xf32>
    %124 = arith.addf %122, %123 : vector<16x32xf32>
    %cst_38 = arith.constant 5.000000e-01 : f32
    %125 = vector.broadcast %cst_38 : f32 to vector<16x32xf32>
    %126 = arith.mulf %125, %124 : vector<16x32xf32>
    %cst_39 = arith.constant 0.707106769 : f32
    %127 = vector.broadcast %cst_39 : f32 to vector<16x32xf32>
    %128 = arith.mulf %124, %127 : vector<16x32xf32>
    %cst_40 = arith.constant 0.000000e+00 : f32
    %129 = vector.broadcast %cst_40 : f32 to vector<16x32xf32>
    %130 = arith.cmpf oge, %128, %129 : vector<16x32xf32>
    %cst_41 = arith.constant 1.000000e+00 : f32
    %cst_42 = arith.constant -1.000000e+00 : f32
    %131 = vector.broadcast %cst_41 : f32 to vector<16x32xf32>
    %132 = vector.broadcast %cst_42 : f32 to vector<16x32xf32>
    %133 = arith.select %130, %131, %132 : vector<16x32xi1>, vector<16x32xf32>
    %134 = math.absf %128 : vector<16x32xf32>
    %cst_43 = arith.constant 0.327591091 : f32
    %135 = vector.broadcast %cst_43 : f32 to vector<16x32xf32>
    %136 = arith.mulf %135, %134 : vector<16x32xf32>
    %cst_44 = arith.constant 1.000000e+00 : f32
    %137 = vector.broadcast %cst_44 : f32 to vector<16x32xf32>
    %138 = arith.addf %137, %136 : vector<16x32xf32>
    %139 = tpu.reciprocal %138 {approx = true} : vector<16x32xf32> -> vector<16x32xf32>
    %cst_45 = arith.constant 1.06140542 : f32
    %140 = vector.broadcast %cst_45 : f32 to vector<16x32xf32>
    %141 = arith.mulf %140, %139 : vector<16x32xf32>
    %cst_46 = arith.constant -1.45315206 : f32
    %142 = vector.broadcast %cst_46 : f32 to vector<16x32xf32>
    %143 = arith.addf %141, %142 : vector<16x32xf32>
    %144 = arith.mulf %143, %139 : vector<16x32xf32>
    %cst_47 = arith.constant 1.42141378 : f32
    %145 = vector.broadcast %cst_47 : f32 to vector<16x32xf32>
    %146 = arith.addf %144, %145 : vector<16x32xf32>
    %147 = arith.mulf %146, %139 : vector<16x32xf32>
    %cst_48 = arith.constant -0.284496725 : f32
    %148 = vector.broadcast %cst_48 : f32 to vector<16x32xf32>
    %149 = arith.addf %147, %148 : vector<16x32xf32>
    %150 = arith.mulf %149, %139 : vector<16x32xf32>
    %cst_49 = arith.constant 0.254829586 : f32
    %151 = vector.broadcast %cst_49 : f32 to vector<16x32xf32>
    %152 = arith.addf %150, %151 : vector<16x32xf32>
    %153 = arith.mulf %152, %139 : vector<16x32xf32>
    %cst_50 = arith.constant 0.000000e+00 : f32
    %154 = vector.broadcast %cst_50 : f32 to vector<16x32xf32>
    %155 = arith.subf %154, %134 : vector<16x32xf32>
    %156 = arith.mulf %155, %134 : vector<16x32xf32>
    %157 = math.exp %156 : vector<16x32xf32>
    %158 = arith.mulf %153, %157 : vector<16x32xf32>
    %cst_51 = arith.constant 1.000000e+00 : f32
    %159 = vector.broadcast %cst_51 : f32 to vector<16x32xf32>
    %160 = arith.subf %159, %158 : vector<16x32xf32>
    %161 = arith.mulf %133, %160 : vector<16x32xf32>
    %cst_52 = arith.constant 1.000000e+00 : f32
    %162 = vector.broadcast %cst_52 : f32 to vector<16x32xf32>
    %163 = arith.addf %162, %161 : vector<16x32xf32>
    %164 = arith.mulf %126, %163 : vector<16x32xf32>
    %165 = arith.addf %164, %120 : vector<16x32xf32>
    %c0_53 = arith.constant 0 : index
    %c0_54 = arith.constant 0 : index
    %166 = vector.load %arg4[%c0_53, %c0_54] : memref<32x128xf32, #tpu.memory_space<vmem>>, vector<32x128xf32>
    %cst_55 = arith.constant dense<0.000000e+00> : vector<16x128xf32>
    %167 = tpu.matmul %165, %166, %cst_55 {dimension_numbers = #tpu.dot_dimension_numbers<[1], [0], [0], [1], [0, 0, 1, 1], [], []>} : vector<16x32xf32>, vector<32x128xf32>, vector<16x128xf32> -> vector<16x128xf32>
    %168 = vector.broadcast %6 : vector<1x128xf32> to vector<16x128xf32>
    %169 = arith.addf %167, %168 : vector<16x128xf32>
    %c0_56 = arith.constant 0 : index
    %c0_57 = arith.constant 0 : index
    %170 = vector.load %arg6[%c0_56, %c0_57] : memref<16x128xf32, #tpu.memory_space<vmem>>, vector<16x128xf32>
    tpu.vector_store %arg6[%c0_56, %c0_57], %169 {strides = array<i32>} : memref<16x128xf32, #tpu.memory_space<vmem>>, vector<16x128xf32>,
    return
  }
}

</mosaic_0001>

<llo_original>
// kernel: _device_forward.1
$region0: #{_device_forward.1}
  #allocation0 [shape = 'u32[]', space=smem, size = 0x4, offset = 0x4, fixed_abs, tag = 'smem constant byte address 0x4 - core index']
  #allocation1 [shape = 'u32[144,128]{1,0:T(1,128)}', space=vmem, size = 0x12000, scoped, tag = 'internal scratch']
  %s0 = inlined_call_operand.vmem [shape: f32[24,64], index: 0, kind: input, shape index: {}]
  %s1 = inlined_call_operand.vmem [shape: f32[64,32], index: 1, kind: input, shape index: {}]
  %s2 = inlined_call_operand.vmem [shape: f32[32,96], index: 2, kind: input, shape index: {}]
  %s3 = inlined_call_operand.vmem [shape: f32[32,64], index: 3, kind: input, shape index: {}]
  %s4 = inlined_call_operand.vmem [shape: f32[32,128], index: 4, kind: input, shape index: {}]
  %s5 = inlined_call_operand.vmem [shape: f32[8,128], index: 5, kind: input, shape index: {}]
  %s6 = inlined_call_operand.vmem [shape: f32[16,128], index: 6, kind: output, shape index: {}]
  %s7 = sld [smem:[#allocation0]]
  $region34: #{_device_forward.1} parent=0
    _
  %s9 = ssub.s32 1, %s7
  %s10 = scalar_select 0, %s9, %s7
  // Predicated region
  $region2: #{_device_forward.1} parent=0 // pred_check
    _
  $region3: #{_device_forward.1} parent=0 // pred_check_branch
    %12 = sbr.rel (0) target = $region5
  $region4: #{_device_forward.1} parent=0 // pred_region
    _
  $region5: #{_device_forward.1} parent=0 // pred_fallthru
    _
  // Predicated region
  $region6: #{_device_forward.1} parent=0 // pred_check
    _
  $region7: #{_device_forward.1} parent=0 // pred_check_branch
    %14 = sbr.rel (0) target = $region9
  $region8: #{_device_forward.1} parent=0 // pred_region
    _
  $region9: #{_device_forward.1} parent=0 // pred_fallthru
    _
  // Predicated region
  $region10: #{_device_forward.1} parent=0 // pred_check
    _
  $region11: #{_device_forward.1} parent=0 // pred_check_branch
    %16 = sbr.rel (0) target = $region13
  $region12: #{_device_forward.1} parent=0 // pred_region
    _
  $region13: #{_device_forward.1} parent=0 // pred_fallthru
    _
  // Predicated region
  $region14: #{_device_forward.1} parent=0 // pred_check
    _
  $region15: #{_device_forward.1} parent=0 // pred_check_branch
    %18 = sbr.rel (0) target = $region17
  $region16: #{_device_forward.1} parent=0 // pred_region
    _
  $region17: #{_device_forward.1} parent=0 // pred_fallthru
    _
  // Predicated region
  $region18: #{_device_forward.1} parent=0 // pred_check
    _
  $region19: #{_device_forward.1} parent=0 // pred_check_branch
    %20 = sbr.rel (0) target = $region21
  $region20: #{_device_forward.1} parent=0 // pred_region
    _
  $region21: #{_device_forward.1} parent=0 // pred_fallthru
    _
  // Predicated region
  $region22: #{_device_forward.1} parent=0 // pred_check
    _
  $region23: #{_device_forward.1} parent=0 // pred_check_branch
    %22 = sbr.rel (0) target = $region25
  $region24: #{_device_forward.1} parent=0 // pred_region
    _
  $region25: #{_device_forward.1} parent=0 // pred_fallthru
    _
  %v23 = vld [vmem:[%s5] sm:$0x1]
  %v24 = vld [vmem:[%s5 + $0x1] sm:$0x1]
  %v25 = vld [vmem:[%s5 + $0x2] sm:$0x1]
  %v26 = vld [vmem:[%s5 + $0x3] sm:$0x1]
  %v27 = vld [vmem:[%s5 + $0x4] sm:$0x1]
  %v28 = vld [vmem:[%s5 + $0x5] sm:$0x1]
  %v29 = vld [vmem:[%s5 + $0x6] sm:$0x1]
  %v30 = vld [vmem:[%s0] sm:$0xff]
  %v31 = vld [vmem:[%s0 + $0x8] sm:$0xff]
  %v32 = vld [vmem:[%s0 + $0x10] sm:$0xff]
  %v33 = vld [vmem:[%s1] sm:$0xff]
  %v34 = vld [vmem:[%s1 + $0x8] sm:$0xff]
  %v35 = vld [vmem:[%s1 + $0x10] sm:$0xff]
  %v36 = vld [vmem:[%s1 + $0x18] sm:$0xff]
  %v37 = vld [vmem:[%s1 + $0x20] sm:$0xff]
  %v38 = vld [vmem:[%s1 + $0x28] sm:$0xff]
  %v39 = vld [vmem:[%s1 + $0x30] sm:$0xff]
  %v40 = vld [vmem:[%s1 + $0x38] sm:$0xff]
  %v41 = vlaneseq
  %v42 = vshrl.u32 %v41, 7
  %v43 = vsub.s32 0, %v42
  %v44 = vrot.slane %v23, %v43
  %vm45 = vcmask 523264
  %v47 = vsel %vm45, %v30, 0
  %v50 = vsel %vm45, %v31, 0
  %v53 = vsel %vm45, %v32, 0
  %55 = vmatprep.subr.mxu0 0.0
  %56 = vmatpush1.msra.mxu0 %v33
  %57 = vmatprep.subr.mxu0 0.0
  %58 = vmatpush1.msra.mxu0 %v34
  %59 = vmatprep.subr.mxu0 0.0
  %60 = vmatpush1.msra.mxu0 %v35
  %61 = vmatprep.subr.mxu0 0.0
  %62 = vmatpush1.msra.mxu0 %v36
  %63 = vmatprep.subr.mxu0 0.0
  %64 = vmatpush1.msra.mxu0 %v37
  %65 = vmatprep.subr.mxu0 0.0
  %66 = vmatpush1.msra.mxu0 %v38
  %67 = vmatprep.subr.mxu0 0.0
  %68 = vmatpush1.msra.mxu0 %v39
  %69 = vmatprep.subr.mxu0 0.0
  %70 = vmatpush1.msra.mxu0 %v40
  %71 = vmatprep.subr.mxu0 0.0
  %72 = vmatpush1.msra.mxu0 0.0
  %73 = vmatprep.subr.mxu0 0.0
  %74 = vmatpush1.msra.mxu0 0.0
  %75 = vmatprep.subr.mxu0 0.0
  %76 = vmatpush1.msra.mxu0 0.0
  %77 = vmatprep.subr.mxu0 0.0
  %78 = vmatpush1.msra.mxu0 0.0
  %79 = vmatprep.subr.mxu0 0.0
  %80 = vmatpush1.msra.mxu0 0.0
  %81 = vmatprep.subr.mxu0 0.0
  %82 = vmatpush1.msra.mxu0 0.0
  %83 = vmatprep.subr.mxu0 0.0
  %84 = vmatpush1.msra.mxu0 0.0
  %85 = vmatprep.subr.mxu0 0.0
  %86 = vmatpush1.msra.mxu0 0.0
  %87 = vmatprep.subr.mxu0 0.0
  %88 = vmatpush1.msra.mxu0 0.0
  %89 = vmatprep.subr.mxu0 0.0
  %90 = vmatpush1.msra.mxu0 0.0
  %91 = vmatprep.subr.mxu0 0.0
  %92 = vmatpush1.msra.mxu0 0.0
  %93 = vmatprep.subr.mxu0 0.0
  %94 = vmatpush1.msra.mxu0 0.0
  %95 = vmatprep.subr.mxu0 0.0
  %96 = vmatpush1.msra.mxu0 0.0
  %97 = vmatprep.subr.mxu0 0.0
  %98 = vmatpush1.msra.mxu0 0.0
  %99 = vmatprep.subr.mxu0 0.0
  %100 = vmatpush1.msra.mxu0 0.0
  %101 = vmatprep.subr.mxu0 0.0
  %102 = vmatpush1.msra.mxu0 0.0
  %103 = vmatprep.subr.mxu0 0.0
  %104 = vmatpush1.msra.mxu0 0.0
  %105 = vmatprep.subr.mxu0 0.0
  %106 = vmatpush1.msra.mxu0 0.0
  %107 = vmatprep.subr.mxu0 0.0
  %108 = vmatpush1.msra.mxu0 0.0
  %109 = vmatprep.subr.mxu0 0.0
  %110 = vmatpush1.msra.mxu0 0.0
  %111 = vmatprep.subr.mxu0 0.0
  %112 = vmatpush1.msra.mxu0 0.0
  %113 = vmatprep.subr.mxu0 0.0
  %114 = vmatpush1.msra.mxu0 0.0
  %115 = vmatprep.subr.mxu0 0.0
  %116 = vmatpush1.msra.mxu0 0.0
  %117 = vmatprep.subr.mxu0 0.0
  %118 = vmatpush1.msra.mxu0 0.0
  %119 = vmatprep.mubr.f32.mxu0 0.0
  %120 = vmatmul.mubr.f32.gmra.mrb[0].mxu0 %v47
  %v121 = vpop.f32.mrb[0].mxu0
  %v122 = vadd.f32 %v44, %v121
  %v123 = vpop.f32.mrb[0].mxu0
  %124 = vmatprep.mubr.f32.mxu0 0.0
  %125 = vmatmul.mubr.f32.gmra.mrb[0].mxu0 %v50
  %v126 = vpop.f32.mrb[0].mxu0
  %v127 = vadd.f32 %v44, %v126
  %v128 = vpop.f32.mrb[0].mxu0
  %129 = vmatprep.mubr.f32.mxu0 0.0
  %130 = vmatmul.mubr.f32.gmra.mrb[0].mxu0 %v53
  %v131 = vpop.f32.mrb[0].mxu0
  %v132 = vadd.f32 %v44, %v131
  %v133 = vpop.f32.mrb[0].mxu0
  %134 = vdwg.mxu0
  %vm135 = vcmask 261120
  %v136 = vsel %vm135, %v122, 0.0
  %137 = vadd.xlane.f32.xlu0 %v136
  %v138 = vpop.xlane.xlu0 %137
  %v139 = vsel %vm135, %v127, 0.0
  %140 = vadd.xlane.f32.xlu0 %v139
  %v141 = vpop.xlane.xlu0 %140
  %v142 = vsel %vm135, %v132, 0.0
  %143 = vadd.xlane.f32.xlu0 %v142
  %v144 = vpop.xlane.xlu0 %143
  %v145 = vrcp.pop 32.0
  %v146 = vmul.f32 %v138, %v145
  %v147 = vmul.f32 %v141, %v145
  %v148 = vmul.f32 %v144, %v145
  %v149 = vsub.f32 %v122, %v146
  %v150 = vsub.f32 %v127, %v147
  %v151 = vsub.f32 %v132, %v148
  %v152 = vmul.f32 %v149, %v149
  %v153 = vmul.f32 %v150, %v150
  %v154 = vmul.f32 %v151, %v151
  %v155 = vsel %vm135, %v152, 0.0
  %156 = vadd.xlane.f32.xlu0 %v155
  %v157 = vpop.xlane.xlu0 %156
  %v158 = vsel %vm135, %v153, 0.0
  %159 = vadd.xlane.f32.xlu0 %v158
  %v160 = vpop.xlane.xlu0 %159
  %v161 = vsel %vm135, %v154, 0.0
  %162 = vadd.xlane.f32.xlu0 %v161
  %v163 = vpop.xlane.xlu0 %162
  %v164 = vmul.f32 %v157, %v145
  %v165 = vmul.f32 %v160, %v145
  %v166 = vmul.f32 %v163, %v145
  %v167 = vadd.f32 %v164, 1e-05
  %v168 = vadd.f32 %v165, 1e-05
  %v169 = vadd.f32 %v166, 1e-05
  %v170 = vrsqrt.pop %v167
  %v171 = vrsqrt.pop %v168
  %v172 = vrsqrt.pop %v169
  %v173 = vmul.f32 %v149, %v170
  %v174 = vmul.f32 %v150, %v171
  %v175 = vmul.f32 %v151, %v172
  %v176 = vlaneseq
  %v177 = vshrl.u32 %v176, 7
  %v178 = vsub.s32 0, %v177
  %v179 = vrot.slane %v24, %v178
  %v180 = vmul.f32 %v173, %v179
  %v181 = vmul.f32 %v174, %v179
  %v182 = vmul.f32 %v175, %v179
  %v183 = vlaneseq
  %v184 = vshrl.u32 %v183, 7
  %v185 = vsub.s32 0, %v184
  %v186 = vrot.slane %v25, %v185
  %v187 = vadd.f32 %v180, %v186
  %v188 = vadd.f32 %v181, %v186
  %v189 = vadd.f32 %v182, %v186
  %v190 = vld [vmem:[%s2] sm:$0xff]
  %v191 = vld [vmem:[%s2 + $0x8] sm:$0xff]
  %v192 = vld [vmem:[%s2 + $0x10] sm:$0xff]
  %v193 = vld [vmem:[%s2 + $0x18] sm:$0xff]
  %v194 = vlaneseq
  %v195 = vshrl.u32 %v194, 7
  %v196 = vsub.s32 0, %v195
  %v197 = vrot.slane %v26, %v196
  %v199 = vsel %vm135, %v187, 0
  %v202 = vsel %vm135, %v188, 0
  %v205 = vsel %vm135, %v189, 0
  %207 = vmatprep.subr.mxu0 0.0
  %208 = vmatpush1.msra.mxu0 %v190
  %209 = vmatprep.subr.mxu0 0.0
  %210 = vmatpush1.msra.mxu0 %v191
  %211 = vmatprep.subr.mxu0 0.0
  %212 = vmatpush1.msra.mxu0 %v192
  %213 = vmatprep.subr.mxu0 0.0
  %214 = vmatpush1.msra.mxu0 %v193
  %215 = vmatprep.subr.mxu0 0.0
  %216 = vmatpush1.msra.mxu0 0.0
  %217 = vmatprep.subr.mxu0 0.0
  %218 = vmatpush1.msra.mxu0 0.0
  %219 = vmatprep.subr.mxu0 0.0
  %220 = vmatpush1.msra.mxu0 0.0
  %221 = vmatprep.subr.mxu0 0.0
  %222 = vmatpush1.msra.mxu0 0.0
  %223 = vmatprep.subr.mxu0 0.0
  %224 = vmatpush1.msra.mxu0 0.0
  %225 = vmatprep.subr.mxu0 0.0
  %226 = vmatpush1.msra.mxu0 0.0
  %227 = vmatprep.subr.mxu0 0.0
  %228 = vmatpush1.msra.mxu0 0.0
  %229 = vmatprep.subr.mxu0 0.0
  %230 = vmatpush1.msra.mxu0 0.0
  %231 = vmatprep.subr.mxu0 0.0
  %232 = vmatpush1.msra.mxu0 0.0
  %233 = vmatprep.subr.mxu0 0.0
  %234 = vmatpush1.msra.mxu0 0.0
  %235 = vmatprep.subr.mxu0 0.0
  %236 = vmatpush1.msra.mxu0 0.0
  %237 = vmatprep.subr.mxu0 0.0
  %238 = vmatpush1.msra.mxu0 0.0
  %239 = vmatprep.subr.mxu0 0.0
  %240 = vmatpush1.msra.mxu0 0.0
  %241 = vmatprep.subr.mxu0 0.0
  %242 = vmatpush1.msra.mxu0 0.0
  %243 = vmatprep.subr.mxu0 0.0
  %244 = vmatpush1.msra.mxu0 0.0
  %245 = vmatprep.subr.mxu0 0.0
  %246 = vmatpush1.msra.mxu0 0.0
  %247 = vmatprep.subr.mxu0 0.0
  %248 = vmatpush1.msra.mxu0 0.0
  %249 = vmatprep.subr.mxu0 0.0
  %250 = vmatpush1.msra.mxu0 0.0
  %251 = vmatprep.subr.mxu0 0.0
  %252 = vmatpush1.msra.mxu0 0.0
  %253 = vmatprep.subr.mxu0 0.0
  %254 = vmatpush1.msra.mxu0 0.0
  %255 = vmatprep.subr.mxu0 0.0
  %256 = vmatpush1.msra.mxu0 0.0
  %257 = vmatprep.subr.mxu0 0.0
  %258 = vmatpush1.msra.mxu0 0.0
  %259 = vmatprep.subr.mxu0 0.0
  %260 = vmatpush1.msra.mxu0 0.0
  %261 = vmatprep.subr.mxu0 0.0
  %262 = vmatpush1.msra.mxu0 0.0
  %263 = vmatprep.subr.mxu0 0.0
  %264 = vmatpush1.msra.mxu0 0.0
  %265 = vmatprep.subr.mxu0 0.0
  %266 = vmatpush1.msra.mxu0 0.0
  %267 = vmatprep.subr.mxu0 0.0
  %268 = vmatpush1.msra.mxu0 0.0
  %269 = vmatprep.subr.mxu0 0.0
  %270 = vmatpush1.msra.mxu0 0.0
  %271 = vmatprep.mubr.f32.mxu0 0.0
  %272 = vmatmul.mubr.f32.gmra.mrb[0].mxu0 %v199
  %v273 = vpop.f32.mrb[0].mxu0
  %v274 = vadd.f32 %v197, %v273
  %v275 = vpop.f32.mrb[0].mxu0
  %276 = vmatprep.mubr.f32.mxu0 0.0
  %277 = vmatmul.mubr.f32.gmra.mrb[0].mxu0 %v202
  %v278 = vpop.f32.mrb[0].mxu0
  %v279 = vadd.f32 %v197, %v278
  %v280 = vpop.f32.mrb[0].mxu0
  %281 = vmatprep.mubr.f32.mxu0 0.0
  %282 = vmatmul.mubr.f32.gmra.mrb[0].mxu0 %v205
  %v283 = vpop.f32.mrb[0].mxu0
  %v284 = vadd.f32 %v197, %v283
  %v285 = vpop.f32.mrb[0].mxu0
  %286 = vdwg.mxu0
  %288 = vrot.lane.b32.xlu0 %v274, 120
  %v289 = vpop.permute.xlu0 %288
  %291 = vrot.lane.b32.xlu0 %v274, 112
  %v292 = vpop.permute.xlu0 %291
  %294 = vrot.lane.b32.xlu0 %v274, 104
  %v295 = vpop.permute.xlu0 %294
  %v297 = vcombine.low %v274, %v292
  %v298 = vcombine.high %v274, %v292
  %v300 = vunpack.c.l.s4 1983009808
  %v301 = vunpack.c.0.s8 %v300
  %v302 = vlaneseq
  %v303 = vshrl.u32 %v302, 7
  %v304 = vsub.s32 %v301, %v303
  %v305 = vrot.slane %v297, %v304
  %v307 = vunpack.c.l.s4 1983009808
  %v308 = vunpack.c.0.s8 %v307
  %v309 = vlaneseq
  %v310 = vshrl.u32 %v309, 7
  %v311 = vsub.s32 %v308, %v310
  %v312 = vrot.slane %v298, %v311
  %v313 = vcombine.low %v289, %v295
  %v314 = vcombine.high %v289, %v295
  %v316 = vunpack.c.l.s4 1983009808
  %v317 = vunpack.c.0.s8 %v316
  %v318 = vlaneseq
  %v319 = vshrl.u32 %v318, 7
  %v320 = vsub.s32 %v317, %v319
  %v321 = vrot.slane %v313, %v320
  %v323 = vunpack.c.l.s4 1983009808
  %v324 = vunpack.c.0.s8 %v323
  %v325 = vlaneseq
  %v326 = vshrl.u32 %v325, 7
  %v327 = vsub.s32 %v324, %v326
  %v328 = vrot.slane %v314, %v327
  %v329 = vcombine.low %v305, %v321
  %v330 = vcombine.high %v305, %v321
  %v332 = vunpack.c.l.s4 1934713408
  %v333 = vunpack.c.0.s8 %v332
  %v334 = vlaneseq
  %v335 = vshrl.u32 %v334, 7
  %v336 = vsub.s32 %v333, %v335
  %v337 = vrot.slane %v329, %v336
  %v339 = vunpack.c.l.s4 1934713408
  %v340 = vunpack.c.0.s8 %v339
  %v341 = vlaneseq
  %v342 = vshrl.u32 %v341, 7
  %v343 = vsub.s32 %v340, %v342
  %v344 = vrot.slane %v330, %v343
  %v345 = vcombine.low %v312, %v328
  %v346 = vcombine.high %v312, %v328
  %v348 = vunpack.c.l.s4 1934713408
  %v349 = vunpack.c.0.s8 %v348
  %v350 = vlaneseq
  %v351 = vshrl.u32 %v350, 7
  %v352 = vsub.s32 %v349, %v351
  %v353 = vrot.slane %v345, %v352
  %v355 = vunpack.c.l.s4 1934713408
  %v356 = vunpack.c.0.s8 %v355
  %v357 = vlaneseq
  %v358 = vshrl.u32 %v357, 7
  %v359 = vsub.s32 %v356, %v358
  %v360 = vrot.slane %v346, %v359
  %v361 = vcombine.high %v337, 0.0
  %v362 = vcombine.high %v344, 0.0
  %v363 = vcombine.high %v353, 0.0
  %v364 = vcombine.high %v360, 0.0
  %v365 = vcombine.low %v337, %v344
  %v367 = vunpack.c.l.s4 1983009808
  %v368 = vunpack.c.0.s8 %v367
  %v369 = vlaneseq
  %v370 = vshrl.u32 %v369, 7
  %v371 = vsub.s32 %v368, %v370
  %v372 = vrot.slane %v365, %v371
  %v373 = vcombine.low %v361, %v362
  %v375 = vunpack.c.l.s4 1983009808
  %v376 = vunpack.c.0.s8 %v375
  %v377 = vlaneseq
  %v378 = vshrl.u32 %v377, 7
  %v379 = vsub.s32 %v376, %v378
  %v380 = vrot.slane %v373, %v379
  %v381 = vcombine.low %v353, %v360
  %v383 = vunpack.c.l.s4 1983009808
  %v384 = vunpack.c.0.s8 %v383
  %v385 = vlaneseq
  %v386 = vshrl.u32 %v385, 7
  %v387 = vsub.s32 %v384, %v386
  %v388 = vrot.slane %v381, %v387
  %v389 = vcombine.low %v363, %v364
  %v391 = vunpack.c.l.s4 1983009808
  %v392 = vunpack.c.0.s8 %v391
  %v393 = vlaneseq
  %v394 = vshrl.u32 %v393, 7
  %v395 = vsub.s32 %v392, %v394
  %v396 = vrot.slane %v389, %v395
  %v397 = vcombine.low %v372, %v380
  %v398 = vcombine.high %v372, %v380
  %v400 = vunpack.c.l.s4 1934713408
  %v401 = vunpack.c.0.s8 %v400
  %v402 = vlaneseq
  %v403 = vshrl.u32 %v402, 7
  %v404 = vsub.s32 %v401, %v403
  %v405 = vrot.slane %v397, %v404
  %v407 = vunpack.c.l.s4 1934713408
  %v408 = vunpack.c.0.s8 %v407
  %v409 = vlaneseq
  %v410 = vshrl.u32 %v409, 7
  %v411 = vsub.s32 %v408, %v410
  %v412 = vrot.slane %v398, %v411
  %v413 = vcombine.low %v388, %v396
  %v414 = vcombine.high %v388, %v396
  %v416 = vunpack.c.l.s4 1934713408
  %v417 = vunpack.c.0.s8 %v416
  %v418 = vlaneseq
  %v419 = vshrl.u32 %v418, 7
  %v420 = vsub.s32 %v417, %v419
  %v421 = vrot.slane %v413, %v420
  %v423 = vunpack.c.l.s4 1934713408
  %v424 = vunpack.c.0.s8 %v423
  %v425 = vlaneseq
  %v426 = vshrl.u32 %v425, 7
  %v427 = vsub.s32 %v424, %v426
  %v428 = vrot.slane %v414, %v427
  %v429 = vcombine.low %v405, %v421
  %v430 = vcombine.high %v405, %v421
  %v431 = vcombine.low %v412, %v428
  %v432 = vcombine.high %v412, %v428
  %434 = vrot.lane.b32.xlu0 %v284, 120
  %v435 = vpop.permute.xlu0 %434
  %436 = vrot.lane.b32.xlu0 %v284, 112
  %v437 = vpop.permute.xlu0 %436
  %438 = vrot.lane.b32.xlu0 %v284, 104
  %v439 = vpop.permute.xlu0 %438
  %440 = vrot.lane.b32.xlu0 %v284, 96
  %v441 = vpop.permute.xlu0 %440
  %442 = vrot.lane.b32.xlu0 %v435, 96
  %v443 = vpop.permute.xlu0 %442
  %444 = vrot.lane.b32.xlu0 %v437, 96
  %v445 = vpop.permute.xlu0 %444
  %446 = vrot.lane.b32.xlu0 %v439, 96
  %v447 = vpop.permute.xlu0 %446
  %v452 = vcombine.low %v441, %v445
  %v454 = vunpack.c.l.s4 1983009808
  %v455 = vunpack.c.0.s8 %v454
  %v456 = vlaneseq
  %v457 = vshrl.u32 %v456, 7
  %v458 = vsub.s32 %v455, %v457
  %v459 = vrot.slane %v452, %v458
  %v460 = vcombine.low %v443, %v447
  %v462 = vunpack.c.l.s4 1983009808
  %v463 = vunpack.c.0.s8 %v462
  %v464 = vlaneseq
  %v465 = vshrl.u32 %v464, 7
  %v466 = vsub.s32 %v463, %v465
  %v467 = vrot.slane %v460, %v466
  %v468 = vcombine.low %v459, %v467
  %v469 = vcombine.high %v459, %v467
  %v471 = vunpack.c.l.s4 1934713408
  %v472 = vunpack.c.0.s8 %v471
  %v473 = vlaneseq
  %v474 = vshrl.u32 %v473, 7
  %v475 = vsub.s32 %v472, %v474
  %v476 = vrot.slane %v468, %v475
  %v478 = vunpack.c.l.s4 1934713408
  %v479 = vunpack.c.0.s8 %v478
  %v480 = vlaneseq
  %v481 = vshrl.u32 %v480, 7
  %v482 = vsub.s32 %v479, %v481
  %v483 = vrot.slane %v469, %v482
  %v484 = vcombine.high %v476, 0.0
  %v485 = vcombine.high %v483, 0.0
  %v486 = vcombine.low %v476, %v483
  %v488 = vunpack.c.l.s4 1983009808
  %v489 = vunpack.c.0.s8 %v488
  %v490 = vlaneseq
  %v491 = vshrl.u32 %v490, 7
  %v492 = vsub.s32 %v489, %v491
  %v493 = vrot.slane %v486, %v492
  %v494 = vcombine.low %v484, %v485
  %v496 = vunpack.c.l.s4 1983009808
  %v497 = vunpack.c.0.s8 %v496
  %v498 = vlaneseq
  %v499 = vshrl.u32 %v498, 7
  %v500 = vsub.s32 %v497, %v499
  %v501 = vrot.slane %v494, %v500
  %v502 = vcombine.low %v493, %v501
  %v503 = vcombine.high %v493, %v501
  %v505 = vunpack.c.l.s4 1934713408
  %v506 = vunpack.c.0.s8 %v505
  %v507 = vlaneseq
  %v508 = vshrl.u32 %v507, 7
  %v509 = vsub.s32 %v506, %v508
  %v510 = vrot.slane %v502, %v509
  %v512 = vunpack.c.l.s4 1934713408
  %v513 = vunpack.c.0.s8 %v512
  %v514 = vlaneseq
  %v515 = vshrl.u32 %v514, 7
  %v516 = vsub.s32 %v513, %v515
  %v517 = vrot.slane %v503, %v516
  %v518 = vcombine.high %v510, 0.0
  %v519 = vcombine.high %v517, 0.0
  %520 = vrot.lane.b32.xlu0 %v284, 64
  %v521 = vpop.permute.xlu0 %520
  %522 = vrot.lane.b32.xlu0 %v435, 64
  %v523 = vpop.permute.xlu0 %522
  %524 = vrot.lane.b32.xlu0 %v437, 64
  %v525 = vpop.permute.xlu0 %524
  %526 = vrot.lane.b32.xlu0 %v439, 64
  %v527 = vpop.permute.xlu0 %526
  %v532 = vcombine.low %v521, %v525
  %v534 = vunpack.c.l.s4 1983009808
  %v535 = vunpack.c.0.s8 %v534
  %v536 = vlaneseq
  %v537 = vshrl.u32 %v536, 7
  %v538 = vsub.s32 %v535, %v537
  %v539 = vrot.slane %v532, %v538
  %v540 = vcombine.low %v523, %v527
  %v542 = vunpack.c.l.s4 1983009808
  %v543 = vunpack.c.0.s8 %v542
  %v544 = vlaneseq
  %v545 = vshrl.u32 %v544, 7
  %v546 = vsub.s32 %v543, %v545
  %v547 = vrot.slane %v540, %v546
  %v548 = vcombine.low %v539, %v547
  %v549 = vcombine.high %v539, %v547
  %v551 = vunpack.c.l.s4 1934713408
  %v552 = vunpack.c.0.s8 %v551
  %v553 = vlaneseq
  %v554 = vshrl.u32 %v553, 7
  %v555 = vsub.s32 %v552, %v554
  %v556 = vrot.slane %v548, %v555
  %v558 = vunpack.c.l.s4 1934713408
  %v559 = vunpack.c.0.s8 %v558
  %v560 = vlaneseq
  %v561 = vshrl.u32 %v560, 7
  %v562 = vsub.s32 %v559, %v561
  %v563 = vrot.slane %v549, %v562
  %v564 = vcombine.high %v556, 0.0
  %v565 = vcombine.high %v563, 0.0
  %v566 = vcombine.low %v556, %v563
  %v568 = vunpack.c.l.s4 1983009808
  %v569 = vunpack.c.0.s8 %v568
  %v570 = vlaneseq
  %v571 = vshrl.u32 %v570, 7
  %v572 = vsub.s32 %v569, %v571
  %v573 = vrot.slane %v566, %v572
  %v574 = vcombine.low %v564, %v565
  %v576 = vunpack.c.l.s4 1983009808
  %v577 = vunpack.c.0.s8 %v576
  %v578 = vlaneseq
  %v579 = vshrl.u32 %v578, 7
  %v580 = vsub.s32 %v577, %v579
  %v581 = vrot.slane %v574, %v580
  %v582 = vcombine.low %v573, %v581
  %v583 = vcombine.high %v573, %v581
  %v585 = vunpack.c.l.s4 1934713408
  %v586 = vunpack.c.0.s8 %v585
  %v587 = vlaneseq
  %v588 = vshrl.u32 %v587, 7
  %v589 = vsub.s32 %v586, %v588
  %v590 = vrot.slane %v582, %v589
  %v592 = vunpack.c.l.s4 1934713408
  %v593 = vunpack.c.0.s8 %v592
  %v594 = vlaneseq
  %v595 = vshrl.u32 %v594, 7
  %v596 = vsub.s32 %v593, %v595
  %v597 = vrot.slane %v583, %v596
  %v598 = vcombine.high %v590, 0.0
  %v599 = vcombine.high %v597, 0.0
  %vm600 = vcmask 64512
  %v602 = vsel %vm600, %v429, 0
  %v605 = vsel %vm600, %v510, 0
  %607 = vmatprep.subr.mxu0 0.0
  %608 = vmatpush1.xpose.msra.mxu0 %v605
  %609 = vmatprep.subr.mxu0 0.0
  %610 = vmatpush1.xpose.msra.mxu0 0.0
  %611 = vmatprep.subr.mxu0 0.0
  %612 = vmatpush1.xpose.msra.mxu0 0.0
  %613 = vmatprep.subr.mxu0 0.0
  %614 = vmatpush1.xpose.msra.mxu0 0.0
  %615 = vmatprep.subr.mxu0 0.0
  %616 = vmatpush1.xpose.msra.mxu0 0.0
  %617 = vmatprep.subr.mxu0 0.0
  %618 = vmatpush1.xpose.msra.mxu0 0.0
  %619 = vmatprep.subr.mxu0 0.0
  %620 = vmatpush1.xpose.msra.mxu0 0.0
  %621 = vmatprep.subr.mxu0 0.0
  %622 = vmatpush1.xpose.msra.mxu0 0.0
  %623 = vmatprep.subr.mxu0 0.0
  %624 = vmatpush1.xpose.msra.mxu0 0.0
  %625 = vmatprep.subr.mxu0 0.0
  %626 = vmatpush1.xpose.msra.mxu0 0.0
  %627 = vmatprep.subr.mxu0 0.0
  %628 = vmatpush1.xpose.msra.mxu0 0.0
  %629 = vmatprep.subr.mxu0 0.0
  %630 = vmatpush1.xpose.msra.mxu0 0.0
  %631 = vmatprep.subr.mxu0 0.0
  %632 = vmatpush1.xpose.msra.mxu0 0.0
  %633 = vmatprep.subr.mxu0 0.0
  %634 = vmatpush1.xpose.msra.mxu0 0.0
  %635 = vmatprep.subr.mxu0 0.0
  %636 = vmatpush1.xpose.msra.mxu0 0.0
  %637 = vmatprep.subr.mxu0 0.0
  %638 = vmatpush1.xpose.msra.mxu0 0.0
  %639 = vmatprep.subr.mxu0 0.0
  %640 = vmatpush1.xpose.msra.mxu0 0.0
  %641 = vmatprep.subr.mxu0 0.0
  %642 = vmatpush1.xpose.msra.mxu0 0.0
  %643 = vmatprep.subr.mxu0 0.0
  %644 = vmatpush1.xpose.msra.mxu0 0.0
  %645 = vmatprep.subr.mxu0 0.0
  %646 = vmatpush1.xpose.msra.mxu0 0.0
  %647 = vmatprep.subr.mxu0 0.0
  %648 = vmatpush1.xpose.msra.mxu0 0.0
  %649 = vmatprep.subr.mxu0 0.0
  %650 = vmatpush1.xpose.msra.mxu0 0.0
  %651 = vmatprep.subr.mxu0 0.0
  %652 = vmatpush1.xpose.msra.mxu0 0.0
  %653 = vmatprep.subr.mxu0 0.0
  %654 = vmatpush1.xpose.msra.mxu0 0.0
  %655 = vmatprep.subr.mxu0 0.0
  %656 = vmatpush1.xpose.msra.mxu0 0.0
  %657 = vmatprep.subr.mxu0 0.0
  %658 = vmatpush1.xpose.msra.mxu0 0.0
  %659 = vmatprep.subr.mxu0 0.0
  %660 = vmatpush1.xpose.msra.mxu0 0.0
  %661 = vmatprep.subr.mxu0 0.0
  %662 = vmatpush1.xpose.msra.mxu0 0.0
  %663 = vmatprep.subr.mxu0 0.0
  %664 = vmatpush1.xpose.msra.mxu0 0.0
  %665 = vmatprep.subr.mxu0 0.0
  %666 = vmatpush1.xpose.msra.mxu0 0.0
  %667 = vmatprep.subr.mxu0 0.0
  %668 = vmatpush1.xpose.msra.mxu0 0.0
  %669 = vmatprep.subr.mxu0 0.0
  %670 = vmatpush1.xpose.msra.mxu0 0.0
  %671 = vmatprep.mubr.f32.mxu0 0.0
  %672 = vmatmul.mubr.f32.gmra.mrb[0].mxu0 %v602
  %v673 = vpop.f32.mrb[0].mxu0
  %v674 = vadd.f32 0.0, %v673
  %v675 = vpop.f32.mrb[0].mxu0
  %676 = vdwg.mxu0
  %v678 = vsel %vm600, %v430, 0
  %v681 = vsel %vm600, %v518, 0
  %683 = vmatprep.subr.mxu0 0.0
  %684 = vmatpush1.xpose.msra.mxu0 %v681
  %685 = vmatprep.subr.mxu0 0.0
  %686 = vmatpush1.xpose.msra.mxu0 0.0
  %687 = vmatprep.subr.mxu0 0.0
  %688 = vmatpush1.xpose.msra.mxu0 0.0
  %689 = vmatprep.subr.mxu0 0.0
  %690 = vmatpush1.xpose.msra.mxu0 0.0
  %691 = vmatprep.subr.mxu0 0.0
  %692 = vmatpush1.xpose.msra.mxu0 0.0
  %693 = vmatprep.subr.mxu0 0.0
  %694 = vmatpush1.xpose.msra.mxu0 0.0
  %695 = vmatprep.subr.mxu0 0.0
  %696 = vmatpush1.xpose.msra.mxu0 0.0
  %697 = vmatprep.subr.mxu0 0.0
  %698 = vmatpush1.xpose.msra.mxu0 0.0
  %699 = vmatprep.subr.mxu0 0.0
  %700 = vmatpush1.xpose.msra.mxu0 0.0
  %701 = vmatprep.subr.mxu0 0.0
  %702 = vmatpush1.xpose.msra.mxu0 0.0
  %703 = vmatprep.subr.mxu0 0.0
  %704 = vmatpush1.xpose.msra.mxu0 0.0
  %705 = vmatprep.subr.mxu0 0.0
  %706 = vmatpush1.xpose.msra.mxu0 0.0
  %707 = vmatprep.subr.mxu0 0.0
  %708 = vmatpush1.xpose.msra.mxu0 0.0
  %709 = vmatprep.subr.mxu0 0.0
  %710 = vmatpush1.xpose.msra.mxu0 0.0
  %711 = vmatprep.subr.mxu0 0.0
  %712 = vmatpush1.xpose.msra.mxu0 0.0
  %713 = vmatprep.subr.mxu0 0.0
  %714 = vmatpush1.xpose.msra.mxu0 0.0
  %715 = vmatprep.subr.mxu0 0.0
  %716 = vmatpush1.xpose.msra.mxu0 0.0
  %717 = vmatprep.subr.mxu0 0.0
  %718 = vmatpush1.xpose.msra.mxu0 0.0
  %719 = vmatprep.subr.mxu0 0.0
  %720 = vmatpush1.xpose.msra.mxu0 0.0
  %721 = vmatprep.subr.mxu0 0.0
  %722 = vmatpush1.xpose.msra.mxu0 0.0
  %723 = vmatprep.subr.mxu0 0.0
  %724 = vmatpush1.xpose.msra.mxu0 0.0
  %725 = vmatprep.subr.mxu0 0.0
  %726 = vmatpush1.xpose.msra.mxu0 0.0
  %727 = vmatprep.subr.mxu0 0.0
  %728 = vmatpush1.xpose.msra.mxu0 0.0
  %729 = vmatprep.subr.mxu0 0.0
  %730 = vmatpush1.xpose.msra.mxu0 0.0
  %731 = vmatprep.subr.mxu0 0.0
  %732 = vmatpush1.xpose.msra.mxu0 0.0
  %733 = vmatprep.subr.mxu0 0.0
  %734 = vmatpush1.xpose.msra.mxu0 0.0
  %735 = vmatprep.subr.mxu0 0.0
  %736 = vmatpush1.xpose.msra.mxu0 0.0
  %737 = vmatprep.subr.mxu0 0.0
  %738 = vmatpush1.xpose.msra.mxu0 0.0
  %739 = vmatprep.subr.mxu0 0.0
  %740 = vmatpush1.xpose.msra.mxu0 0.0
  %741 = vmatprep.subr.mxu0 0.0
  %742 = vmatpush1.xpose.msra.mxu0 0.0
  %743 = vmatprep.subr.mxu0 0.0
  %744 = vmatpush1.xpose.msra.mxu0 0.0
  %745 = vmatprep.subr.mxu0 0.0
  %746 = vmatpush1.xpose.msra.mxu0 0.0
  %747 = vmatprep.mubr.f32.mxu0 0.0
  %748 = vmatmul.mubr.f32.gmra.mrb[0].mxu0 %v678
  %v749 = vpop.f32.mrb[0].mxu0
  %v750 = vadd.f32 0.0, %v749
  %v751 = vpop.f32.mrb[0].mxu0
  %752 = vdwg.mxu0
  %v754 = vsel %vm600, %v431, 0
  %v757 = vsel %vm600, %v517, 0
  %759 = vmatprep.subr.mxu0 0.0
  %760 = vmatpush1.xpose.msra.mxu0 %v757
  %761 = vmatprep.subr.mxu0 0.0
  %762 = vmatpush1.xpose.msra.mxu0 0.0
  %763 = vmatprep.subr.mxu0 0.0
  %764 = vmatpush1.xpose.msra.mxu0 0.0
  %765 = vmatprep.subr.mxu0 0.0
  %766 = vmatpush1.xpose.msra.mxu0 0.0
  %767 = vmatprep.subr.mxu0 0.0
  %768 = vmatpush1.xpose.msra.mxu0 0.0
  %769 = vmatprep.subr.mxu0 0.0
  %770 = vmatpush1.xpose.msra.mxu0 0.0
  %771 = vmatprep.subr.mxu0 0.0
  %772 = vmatpush1.xpose.msra.mxu0 0.0
  %773 = vmatprep.subr.mxu0 0.0
  %774 = vmatpush1.xpose.msra.mxu0 0.0
  %775 = vmatprep.subr.mxu0 0.0
  %776 = vmatpush1.xpose.msra.mxu0 0.0
  %777 = vmatprep.subr.mxu0 0.0
  %778 = vmatpush1.xpose.msra.mxu0 0.0
  %779 = vmatprep.subr.mxu0 0.0
  %780 = vmatpush1.xpose.msra.mxu0 0.0
  %781 = vmatprep.subr.mxu0 0.0
  %782 = vmatpush1.xpose.msra.mxu0 0.0
  %783 = vmatprep.subr.mxu0 0.0
  %784 = vmatpush1.xpose.msra.mxu0 0.0
  %785 = vmatprep.subr.mxu0 0.0
  %786 = vmatpush1.xpose.msra.mxu0 0.0
  %787 = vmatprep.subr.mxu0 0.0
  %788 = vmatpush1.xpose.msra.mxu0 0.0
  %789 = vmatprep.subr.mxu0 0.0
  %790 = vmatpush1.xpose.msra.mxu0 0.0
  %791 = vmatprep.subr.mxu0 0.0
  %792 = vmatpush1.xpose.msra.mxu0 0.0
  %793 = vmatprep.subr.mxu0 0.0
  %794 = vmatpush1.xpose.msra.mxu0 0.0
  %795 = vmatprep.subr.mxu0 0.0
  %796 = vmatpush1.xpose.msra.mxu0 0.0
  %797 = vmatprep.subr.mxu0 0.0
  %798 = vmatpush1.xpose.msra.mxu0 0.0
  %799 = vmatprep.subr.mxu0 0.0
  %800 = vmatpush1.xpose.msra.mxu0 0.0
  %801 = vmatprep.subr.mxu0 0.0
  %802 = vmatpush1.xpose.msra.mxu0 0.0
  %803 = vmatprep.subr.mxu0 0.0
  %804 = vmatpush1.xpose.msra.mxu0 0.0
  %805 = vmatprep.subr.mxu0 0.0
  %806 = vmatpush1.xpose.msra.mxu0 0.0
  %807 = vmatprep.subr.mxu0 0.0
  %808 = vmatpush1.xpose.msra.mxu0 0.0
  %809 = vmatprep.subr.mxu0 0.0
  %810 = vmatpush1.xpose.msra.mxu0 0.0
  %811 = vmatprep.subr.mxu0 0.0
  %812 = vmatpush1.xpose.msra.mxu0 0.0
  %813 = vmatprep.subr.mxu0 0.0
  %814 = vmatpush1.xpose.msra.mxu0 0.0
  %815 = vmatprep.subr.mxu0 0.0
  %816 = vmatpush1.xpose.msra.mxu0 0.0
  %817 = vmatprep.subr.mxu0 0.0
  %818 = vmatpush1.xpose.msra.mxu0 0.0
  %819 = vmatprep.subr.mxu0 0.0
  %820 = vmatpush1.xpose.msra.mxu0 0.0
  %821 = vmatprep.subr.mxu0 0.0
  %822 = vmatpush1.xpose.msra.mxu0 0.0
  %823 = vmatprep.mubr.f32.mxu0 0.0
  %824 = vmatmul.mubr.f32.gmra.mrb[0].mxu0 %v754
  %v825 = vpop.f32.mrb[0].mxu0
  %v826 = vadd.f32 0.0, %v825
  %v827 = vpop.f32.mrb[0].mxu0
  %828 = vdwg.mxu0
  %v830 = vsel %vm600, %v432, 0
  %v833 = vsel %vm600, %v519, 0
  %835 = vmatprep.subr.mxu0 0.0
  %836 = vmatpush1.xpose.msra.mxu0 %v833
  %837 = vmatprep.subr.mxu0 0.0
  %838 = vmatpush1.xpose.msra.mxu0 0.0
  %839 = vmatprep.subr.mxu0 0.0
  %840 = vmatpush1.xpose.msra.mxu0 0.0
  %841 = vmatprep.subr.mxu0 0.0
  %842 = vmatpush1.xpose.msra.mxu0 0.0
  %843 = vmatprep.subr.mxu0 0.0
  %844 = vmatpush1.xpose.msra.mxu0 0.0
  %845 = vmatprep.subr.mxu0 0.0
  %846 = vmatpush1.xpose.msra.mxu0 0.0
  %847 = vmatprep.subr.mxu0 0.0
  %848 = vmatpush1.xpose.msra.mxu0 0.0
  %849 = vmatprep.subr.mxu0 0.0
  %850 = vmatpush1.xpose.msra.mxu0 0.0
  %851 = vmatprep.subr.mxu0 0.0
  %852 = vmatpush1.xpose.msra.mxu0 0.0
  %853 = vmatprep.subr.mxu0 0.0
  %854 = vmatpush1.xpose.msra.mxu0 0.0
  %855 = vmatprep.subr.mxu0 0.0
  %856 = vmatpush1.xpose.msra.mxu0 0.0
  %857 = vmatprep.subr.mxu0 0.0
  %858 = vmatpush1.xpose.msra.mxu0 0.0
  %859 = vmatprep.subr.mxu0 0.0
  %860 = vmatpush1.xpose.msra.mxu0 0.0
  %861 = vmatprep.subr.mxu0 0.0
  %862 = vmatpush1.xpose.msra.mxu0 0.0
  %863 = vmatprep.subr.mxu0 0.0
  %864 = vmatpush1.xpose.msra.mxu0 0.0
  %865 = vmatprep.subr.mxu0 0.0
  %866 = vmatpush1.xpose.msra.mxu0 0.0
  %867 = vmatprep.subr.mxu0 0.0
  %868 = vmatpush1.xpose.msra.mxu0 0.0
  %869 = vmatprep.subr.mxu0 0.0
  %870 = vmatpush1.xpose.msra.mxu0 0.0
  %871 = vmatprep.subr.mxu0 0.0
  %872 = vmatpush1.xpose.msra.mxu0 0.0
  %873 = vmatprep.subr.mxu0 0.0
  %874 = vmatpush1.xpose.msra.mxu0 0.0
  %875 = vmatprep.subr.mxu0 0.0
  %876 = vmatpush1.xpose.msra.mxu0 0.0
  %877 = vmatprep.subr.mxu0 0.0
  %878 = vmatpush1.xpose.msra.mxu0 0.0
  %879 = vmatprep.subr.mxu0 0.0
  %880 = vmatpush1.xpose.msra.mxu0 0.0
  %881 = vmatprep.subr.mxu0 0.0
  %882 = vmatpush1.xpose.msra.mxu0 0.0
  %883 = vmatprep.subr.mxu0 0.0
  %884 = vmatpush1.xpose.msra.mxu0 0.0
  %885 = vmatprep.subr.mxu0 0.0
  %886 = vmatpush1.xpose.msra.mxu0 0.0
  %887 = vmatprep.subr.mxu0 0.0
  %888 = vmatpush1.xpose.msra.mxu0 0.0
  %889 = vmatprep.subr.mxu0 0.0
  %890 = vmatpush1.xpose.msra.mxu0 0.0
  %891 = vmatprep.subr.mxu0 0.0
  %892 = vmatpush1.xpose.msra.mxu0 0.0
  %893 = vmatprep.subr.mxu0 0.0
  %894 = vmatpush1.xpose.msra.mxu0 0.0
  %895 = vmatprep.subr.mxu0 0.0
  %896 = vmatpush1.xpose.msra.mxu0 0.0
  %897 = vmatprep.subr.mxu0 0.0
  %898 = vmatpush1.xpose.msra.mxu0 0.0
  %899 = vmatprep.mubr.f32.mxu0 0.0
  %900 = vmatmul.mubr.f32.gmra.mrb[0].mxu0 %v830
  %v901 = vpop.f32.mrb[0].mxu0
  %v902 = vadd.f32 0.0, %v901
  %v903 = vpop.f32.mrb[0].mxu0
  %904 = vdwg.mxu0
  %v905 = vmul.f32 %v674, 0.35355338
  %v906 = vmul.f32 %v750, 0.35355338
  %v907 = vmul.f32 %v826, 0.35355338
  %v908 = vmul.f32 %v902, 0.35355338
  %vm909 = vcmask 31744
  %v910 = vsel %vm909, %v905, -inf
  %911 = vmax.xlane.f32.xlu0 %v910
  %v912 = vpop.xlane.xlu0 %911
  %v913 = vsel %vm909, %v906, -inf
  %914 = vmax.xlane.f32.xlu0 %v913
  %v915 = vpop.xlane.xlu0 %914
  %v916 = vsel %vm909, %v907, -inf
  %917 = vmax.xlane.f32.xlu0 %v916
  %v918 = vpop.xlane.xlu0 %917
  %v919 = vsel %vm909, %v908, -inf
  %920 = vmax.xlane.f32.xlu0 %v919
  %v921 = vpop.xlane.xlu0 %920
  %v922 = vsub.f32 %v905, %v912
  %v923 = vsub.f32 %v906, %v915
  %v924 = vsub.f32 %v907, %v918
  %v925 = vsub.f32 %v908, %v921
  %v926 = vmul.f32 %v922, 1.442695
  %v927 = vpow.pop %v926
  %v928 = vmul.f32 %v923, 1.442695
  %v929 = vpow.pop %v928
  %v930 = vmul.f32 %v924, 1.442695
  %v931 = vpow.pop %v930
  %v932 = vmul.f32 %v925, 1.442695
  %v933 = vpow.pop %v932
  %v934 = vsel %vm909, %v927, 0.0
  %935 = vadd.xlane.f32.xlu0 %v934
  %v936 = vpop.xlane.xlu0 %935
  %v937 = vsel %vm909, %v929, 0.0
  %938 = vadd.xlane.f32.xlu0 %v937
  %v939 = vpop.xlane.xlu0 %938
  %v940 = vsel %vm909, %v931, 0.0
  %941 = vadd.xlane.f32.xlu0 %v940
  %v942 = vpop.xlane.xlu0 %941
  %v943 = vsel %vm909, %v933, 0.0
  %944 = vadd.xlane.f32.xlu0 %v943
  %v945 = vpop.xlane.xlu0 %944
  %v946 = vrcp.pop %v936
  %v947 = vrcp.pop %v939
  %v948 = vrcp.pop %v942
  %v949 = vrcp.pop %v945
  %v950 = vmul.f32 %v927, %v946
  %v951 = vmul.f32 %v929, %v947
  %v952 = vmul.f32 %v931, %v948
  %v953 = vmul.f32 %v933, %v949
  %v955 = vsel %vm909, %v950, 0
  %vm957 = vcmask 1043456
  %v959 = vsel %vm957, %v590, 0
  %961 = vmatprep.subr.mxu0 0.0
  %962 = vmatpush1.msra.mxu0 %v959
  %963 = vmatprep.subr.mxu0 0.0
  %964 = vmatpush1.msra.mxu0 0.0
  %965 = vmatprep.subr.mxu0 0.0
  %966 = vmatpush1.msra.mxu0 0.0
  %967 = vmatprep.subr.mxu0 0.0
  %968 = vmatpush1.msra.mxu0 0.0
  %969 = vmatprep.subr.mxu0 0.0
  %970 = vmatpush1.msra.mxu0 0.0
  %971 = vmatprep.subr.mxu0 0.0
  %972 = vmatpush1.msra.mxu0 0.0
  %973 = vmatprep.subr.mxu0 0.0
  %974 = vmatpush1.msra.mxu0 0.0
  %975 = vmatprep.subr.mxu0 0.0
  %976 = vmatpush1.msra.mxu0 0.0
  %977 = vmatprep.subr.mxu0 0.0
  %978 = vmatpush1.msra.mxu0 0.0
  %979 = vmatprep.subr.mxu0 0.0
  %980 = vmatpush1.msra.mxu0 0.0
  %981 = vmatprep.subr.mxu0 0.0
  %982 = vmatpush1.msra.mxu0 0.0
  %983 = vmatprep.subr.mxu0 0.0
  %984 = vmatpush1.msra.mxu0 0.0
  %985 = vmatprep.subr.mxu0 0.0
  %986 = vmatpush1.msra.mxu0 0.0
  %987 = vmatprep.subr.mxu0 0.0
  %988 = vmatpush1.msra.mxu0 0.0
  %989 = vmatprep.subr.mxu0 0.0
  %990 = vmatpush1.msra.mxu0 0.0
  %991 = vmatprep.subr.mxu0 0.0
  %992 = vmatpush1.msra.mxu0 0.0
  %993 = vmatprep.subr.mxu0 0.0
  %994 = vmatpush1.msra.mxu0 0.0
  %995 = vmatprep.subr.mxu0 0.0
  %996 = vmatpush1.msra.mxu0 0.0
  %997 = vmatprep.subr.mxu0 0.0
  %998 = vmatpush1.msra.mxu0 0.0
  %999 = vmatprep.subr.mxu0 0.0
  %1000 = vmatpush1.msra.mxu0 0.0
  %1001 = vmatprep.subr.mxu0 0.0
  %1002 = vmatpush1.msra.mxu0 0.0
  %1003 = vmatprep.subr.mxu0 0.0
  %1004 = vmatpush1.msra.mxu0 0.0
  %1005 = vmatprep.subr.mxu0 0.0
  %1006 = vmatpush1.msra.mxu0 0.0
  %1007 = vmatprep.subr.mxu0 0.0
  %1008 = vmatpush1.msra.mxu0 0.0
  %1009 = vmatprep.subr.mxu0 0.0
  %1010 = vmatpush1.msra.mxu0 0.0
  %1011 = vmatprep.subr.mxu0 0.0
  %1012 = vmatpush1.msra.mxu0 0.0
  %1013 = vmatprep.subr.mxu0 0.0
  %1014 = vmatpush1.msra.mxu0 0.0
  %1015 = vmatprep.subr.mxu0 0.0
  %1016 = vmatpush1.msra.mxu0 0.0
  %1017 = vmatprep.subr.mxu0 0.0
  %1018 = vmatpush1.msra.mxu0 0.0
  %1019 = vmatprep.subr.mxu0 0.0
  %1020 = vmatpush1.msra.mxu0 0.0
  %1021 = vmatprep.subr.mxu0 0.0
  %1022 = vmatpush1.msra.mxu0 0.0
  %1023 = vmatprep.subr.mxu0 0.0
  %1024 = vmatpush1.msra.mxu0 0.0
  %1025 = vmatprep.mubr.f32.mxu0 0.0
  %1026 = vmatmul.mubr.f32.gmra.mrb[0].mxu0 %v955
  %v1027 = vpop.f32.mrb[0].mxu0
  %v1028 = vadd.f32 0.0, %v1027
  %v1029 = vpop.f32.mrb[0].mxu0
  %1030 = vdwg.mxu0
  %v1032 = vsel %vm909, %v951, 0
  %v1035 = vsel %vm957, %v598, 0
  %1037 = vmatprep.subr.mxu0 0.0
  %1038 = vmatpush1.msra.mxu0 %v1035
  %1039 = vmatprep.subr.mxu0 0.0
  %1040 = vmatpush1.msra.mxu0 0.0
  %1041 = vmatprep.subr.mxu0 0.0
  %1042 = vmatpush1.msra.mxu0 0.0
  %1043 = vmatprep.subr.mxu0 0.0
  %1044 = vmatpush1.msra.mxu0 0.0
  %1045 = vmatprep.subr.mxu0 0.0
  %1046 = vmatpush1.msra.mxu0 0.0
  %1047 = vmatprep.subr.mxu0 0.0
  %1048 = vmatpush1.msra.mxu0 0.0
  %1049 = vmatprep.subr.mxu0 0.0
  %1050 = vmatpush1.msra.mxu0 0.0
  %1051 = vmatprep.subr.mxu0 0.0
  %1052 = vmatpush1.msra.mxu0 0.0
  %1053 = vmatprep.subr.mxu0 0.0
  %1054 = vmatpush1.msra.mxu0 0.0
  %1055 = vmatprep.subr.mxu0 0.0
  %1056 = vmatpush1.msra.mxu0 0.0
  %1057 = vmatprep.subr.mxu0 0.0
  %1058 = vmatpush1.msra.mxu0 0.0
  %1059 = vmatprep.subr.mxu0 0.0
  %1060 = vmatpush1.msra.mxu0 0.0
  %1061 = vmatprep.subr.mxu0 0.0
  %1062 = vmatpush1.msra.mxu0 0.0
  %1063 = vmatprep.subr.mxu0 0.0
  %1064 = vmatpush1.msra.mxu0 0.0
  %1065 = vmatprep.subr.mxu0 0.0
  %1066 = vmatpush1.msra.mxu0 0.0
  %1067 = vmatprep.subr.mxu0 0.0
  %1068 = vmatpush1.msra.mxu0 0.0
  %1069 = vmatprep.subr.mxu0 0.0
  %1070 = vmatpush1.msra.mxu0 0.0
  %1071 = vmatprep.subr.mxu0 0.0
  %1072 = vmatpush1.msra.mxu0 0.0
  %1073 = vmatprep.subr.mxu0 0.0
  %1074 = vmatpush1.msra.mxu0 0.0
  %1075 = vmatprep.subr.mxu0 0.0
  %1076 = vmatpush1.msra.mxu0 0.0
  %1077 = vmatprep.subr.mxu0 0.0
  %1078 = vmatpush1.msra.mxu0 0.0
  %1079 = vmatprep.subr.mxu0 0.0
  %1080 = vmatpush1.msra.mxu0 0.0
  %1081 = vmatprep.subr.mxu0 0.0
  %1082 = vmatpush1.msra.mxu0 0.0
  %1083 = vmatprep.subr.mxu0 0.0
  %1084 = vmatpush1.msra.mxu0 0.0
  %1085 = vmatprep.subr.mxu0 0.0
  %1086 = vmatpush1.msra.mxu0 0.0
  %1087 = vmatprep.subr.mxu0 0.0
  %1088 = vmatpush1.msra.mxu0 0.0
  %1089 = vmatprep.subr.mxu0 0.0
  %1090 = vmatpush1.msra.mxu0 0.0
  %1091 = vmatprep.subr.mxu0 0.0
  %1092 = vmatpush1.msra.mxu0 0.0
  %1093 = vmatprep.subr.mxu0 0.0
  %1094 = vmatpush1.msra.mxu0 0.0
  %1095 = vmatprep.subr.mxu0 0.0
  %1096 = vmatpush1.msra.mxu0 0.0
  %1097 = vmatprep.subr.mxu0 0.0
  %1098 = vmatpush1.msra.mxu0 0.0
  %1099 = vmatprep.subr.mxu0 0.0
  %1100 = vmatpush1.msra.mxu0 0.0
  %1101 = vmatprep.mubr.f32.mxu0 0.0
  %1102 = vmatmul.mubr.f32.gmra.mrb[0].mxu0 %v1032
  %v1103 = vpop.f32.mrb[0].mxu0
  %v1104 = vadd.f32 0.0, %v1103
  %v1105 = vpop.f32.mrb[0].mxu0
  %1106 = vdwg.mxu0
  %v1108 = vsel %vm909, %v952, 0
  %v1111 = vsel %vm957, %v597, 0
  %1113 = vmatprep.subr.mxu0 0.0
  %1114 = vmatpush1.msra.mxu0 %v1111
  %1115 = vmatprep.subr.mxu0 0.0
  %1116 = vmatpush1.msra.mxu0 0.0
  %1117 = vmatprep.subr.mxu0 0.0
  %1118 = vmatpush1.msra.mxu0 0.0
  %1119 = vmatprep.subr.mxu0 0.0
  %1120 = vmatpush1.msra.mxu0 0.0
  %1121 = vmatprep.subr.mxu0 0.0
  %1122 = vmatpush1.msra.mxu0 0.0
  %1123 = vmatprep.subr.mxu0 0.0
  %1124 = vmatpush1.msra.mxu0 0.0
  %1125 = vmatprep.subr.mxu0 0.0
  %1126 = vmatpush1.msra.mxu0 0.0
  %1127 = vmatprep.subr.mxu0 0.0
  %1128 = vmatpush1.msra.mxu0 0.0
  %1129 = vmatprep.subr.mxu0 0.0
  %1130 = vmatpush1.msra.mxu0 0.0
  %1131 = vmatprep.subr.mxu0 0.0
  %1132 = vmatpush1.msra.mxu0 0.0
  %1133 = vmatprep.subr.mxu0 0.0
  %1134 = vmatpush1.msra.mxu0 0.0
  %1135 = vmatprep.subr.mxu0 0.0
  %1136 = vmatpush1.msra.mxu0 0.0
  %1137 = vmatprep.subr.mxu0 0.0
  %1138 = vmatpush1.msra.mxu0 0.0
  %1139 = vmatprep.subr.mxu0 0.0
  %1140 = vmatpush1.msra.mxu0 0.0
  %1141 = vmatprep.subr.mxu0 0.0
  %1142 = vmatpush1.msra.mxu0 0.0
  %1143 = vmatprep.subr.mxu0 0.0
  %1144 = vmatpush1.msra.mxu0 0.0
  %1145 = vmatprep.subr.mxu0 0.0
  %1146 = vmatpush1.msra.mxu0 0.0
  %1147 = vmatprep.subr.mxu0 0.0
  %1148 = vmatpush1.msra.mxu0 0.0
  %1149 = vmatprep.subr.mxu0 0.0
  %1150 = vmatpush1.msra.mxu0 0.0
  %1151 = vmatprep.subr.mxu0 0.0
  %1152 = vmatpush1.msra.mxu0 0.0
  %1153 = vmatprep.subr.mxu0 0.0
  %1154 = vmatpush1.msra.mxu0 0.0
  %1155 = vmatprep.subr.mxu0 0.0
  %1156 = vmatpush1.msra.mxu0 0.0
  %1157 = vmatprep.subr.mxu0 0.0
  %1158 = vmatpush1.msra.mxu0 0.0
  %1159 = vmatprep.subr.mxu0 0.0
  %1160 = vmatpush1.msra.mxu0 0.0
  %1161 = vmatprep.subr.mxu0 0.0
  %1162 = vmatpush1.msra.mxu0 0.0
  %1163 = vmatprep.subr.mxu0 0.0
  %1164 = vmatpush1.msra.mxu0 0.0
  %1165 = vmatprep.subr.mxu0 0.0
  %1166 = vmatpush1.msra.mxu0 0.0
  %1167 = vmatprep.subr.mxu0 0.0
  %1168 = vmatpush1.msra.mxu0 0.0
  %1169 = vmatprep.subr.mxu0 0.0
  %1170 = vmatpush1.msra.mxu0 0.0
  %1171 = vmatprep.subr.mxu0 0.0
  %1172 = vmatpush1.msra.mxu0 0.0
  %1173 = vmatprep.subr.mxu0 0.0
  %1174 = vmatpush1.msra.mxu0 0.0
  %1175 = vmatprep.subr.mxu0 0.0
  %1176 = vmatpush1.msra.mxu0 0.0
  %1177 = vmatprep.mubr.f32.mxu0 0.0
  %1178 = vmatmul.mubr.f32.gmra.mrb[0].mxu0 %v1108
  %v1179 = vpop.f32.mrb[0].mxu0
  %v1180 = vadd.f32 0.0, %v1179
  %v1181 = vpop.f32.mrb[0].mxu0
  %1182 = vdwg.mxu0
  %v1184 = vsel %vm909, %v953, 0
  %v1187 = vsel %vm957, %v599, 0
  %1189 = vmatprep.subr.mxu0 0.0
  %1190 = vmatpush1.msra.mxu0 %v1187
  %1191 = vmatprep.subr.mxu0 0.0
  %1192 = vmatpush1.msra.mxu0 0.0
  %1193 = vmatprep.subr.mxu0 0.0
  %1194 = vmatpush1.msra.mxu0 0.0
  %1195 = vmatprep.subr.mxu0 0.0
  %1196 = vmatpush1.msra.mxu0 0.0
  %1197 = vmatprep.subr.mxu0 0.0
  %1198 = vmatpush1.msra.mxu0 0.0
  %1199 = vmatprep.subr.mxu0 0.0
  %1200 = vmatpush1.msra.mxu0 0.0
  %1201 = vmatprep.subr.mxu0 0.0
  %1202 = vmatpush1.msra.mxu0 0.0
  %1203 = vmatprep.subr.mxu0 0.0
  %1204 = vmatpush1.msra.mxu0 0.0
  %1205 = vmatprep.subr.mxu0 0.0
  %1206 = vmatpush1.msra.mxu0 0.0
  %1207 = vmatprep.subr.mxu0 0.0
  %1208 = vmatpush1.msra.mxu0 0.0
  %1209 = vmatprep.subr.mxu0 0.0
  %1210 = vmatpush1.msra.mxu0 0.0
  %1211 = vmatprep.subr.mxu0 0.0
  %1212 = vmatpush1.msra.mxu0 0.0
  %1213 = vmatprep.subr.mxu0 0.0
  %1214 = vmatpush1.msra.mxu0 0.0
  %1215 = vmatprep.subr.mxu0 0.0
  %1216 = vmatpush1.msra.mxu0 0.0
  %1217 = vmatprep.subr.mxu0 0.0
  %1218 = vmatpush1.msra.mxu0 0.0
  %1219 = vmatprep.subr.mxu0 0.0
  %1220 = vmatpush1.msra.mxu0 0.0
  %1221 = vmatprep.subr.mxu0 0.0
  %1222 = vmatpush1.msra.mxu0 0.0
  %1223 = vmatprep.subr.mxu0 0.0
  %1224 = vmatpush1.msra.mxu0 0.0
  %1225 = vmatprep.subr.mxu0 0.0
  %1226 = vmatpush1.msra.mxu0 0.0
  %1227 = vmatprep.subr.mxu0 0.0
  %1228 = vmatpush1.msra.mxu0 0.0
  %1229 = vmatprep.subr.mxu0 0.0
  %1230 = vmatpush1.msra.mxu0 0.0
  %1231 = vmatprep.subr.mxu0 0.0
  %1232 = vmatpush1.msra.mxu0 0.0
  %1233 = vmatprep.subr.mxu0 0.0
  %1234 = vmatpush1.msra.mxu0 0.0
  %1235 = vmatprep.subr.mxu0 0.0
  %1236 = vmatpush1.msra.mxu0 0.0
  %1237 = vmatprep.subr.mxu0 0.0
  %1238 = vmatpush1.msra.mxu0 0.0
  %1239 = vmatprep.subr.mxu0 0.0
  %1240 = vmatpush1.msra.mxu0 0.0
  %1241 = vmatprep.subr.mxu0 0.0
  %1242 = vmatpush1.msra.mxu0 0.0
  %1243 = vmatprep.subr.mxu0 0.0
  %1244 = vmatpush1.msra.mxu0 0.0
  %1245 = vmatprep.subr.mxu0 0.0
  %1246 = vmatpush1.msra.mxu0 0.0
  %1247 = vmatprep.subr.mxu0 0.0
  %1248 = vmatpush1.msra.mxu0 0.0
  %1249 = vmatprep.subr.mxu0 0.0
  %1250 = vmatpush1.msra.mxu0 0.0
  %1251 = vmatprep.subr.mxu0 0.0
  %1252 = vmatpush1.msra.mxu0 0.0
  %1253 = vmatprep.mubr.f32.mxu0 0.0
  %1254 = vmatmul.mubr.f32.gmra.mrb[0].mxu0 %v1184
  %v1255 = vpop.f32.mrb[0].mxu0
  %v1256 = vadd.f32 0.0, %v1255
  %v1257 = vpop.f32.mrb[0].mxu0
  %1258 = vdwg.mxu0
  %v1259 = vcombine.low %v1028, %v1180
  %v1260 = vcombine.high %v1028, %v1180
  %v1262 = vunpack.c.l.s4 1983009808
  %v1263 = vunpack.c.0.s8 %v1262
  %v1264 = vlaneseq
  %v1265 = vshrl.u32 %v1264, 7
  %v1266 = vsub.s32 %v1263, %v1265
  %v1267 = vrot.slane %v1259, %v1266
  %v1269 = vunpack.c.l.s4 1983009808
  %v1270 = vunpack.c.0.s8 %v1269
  %v1271 = vlaneseq
  %v1272 = vshrl.u32 %v1271, 7
  %v1273 = vsub.s32 %v1270, %v1272
  %v1274 = vrot.slane %v1260, %v1273
  %v1275 = vcombine.low %v1104, %v1256
  %v1276 = vcombine.high %v1104, %v1256
  %v1278 = vunpack.c.l.s4 1983009808
  %v1279 = vunpack.c.0.s8 %v1278
  %v1280 = vlaneseq
  %v1281 = vshrl.u32 %v1280, 7
  %v1282 = vsub.s32 %v1279, %v1281
  %v1283 = vrot.slane %v1275, %v1282
  %v1285 = vunpack.c.l.s4 1983009808
  %v1286 = vunpack.c.0.s8 %v1285
  %v1287 = vlaneseq
  %v1288 = vshrl.u32 %v1287, 7
  %v1289 = vsub.s32 %v1286, %v1288
  %v1290 = vrot.slane %v1276, %v1289
  %v1291 = vcombine.low %v1267, %v1283
  %v1292 = vcombine.high %v1267, %v1283
  %v1294 = vunpack.c.l.s4 1934713408
  %v1295 = vunpack.c.0.s8 %v1294
  %v1296 = vlaneseq
  %v1297 = vshrl.u32 %v1296, 7
  %v1298 = vsub.s32 %v1295, %v1297
  %v1299 = vrot.slane %v1291, %v1298
  %v1301 = vunpack.c.l.s4 1934713408
  %v1302 = vunpack.c.0.s8 %v1301
  %v1303 = vlaneseq
  %v1304 = vshrl.u32 %v1303, 7
  %v1305 = vsub.s32 %v1302, %v1304
  %v1306 = vrot.slane %v1292, %v1305
  %v1307 = vcombine.low %v1274, %v1290
  %v1308 = vcombine.high %v1274, %v1290
  %v1310 = vunpack.c.l.s4 1934713408
  %v1311 = vunpack.c.0.s8 %v1310
  %v1312 = vlaneseq
  %v1313 = vshrl.u32 %v1312, 7
  %v1314 = vsub.s32 %v1311, %v1313
  %v1315 = vrot.slane %v1307, %v1314
  %v1317 = vunpack.c.l.s4 1934713408
  %v1318 = vunpack.c.0.s8 %v1317
  %v1319 = vlaneseq
  %v1320 = vshrl.u32 %v1319, 7
  %v1321 = vsub.s32 %v1318, %v1320
  %v1322 = vrot.slane %v1308, %v1321
  %v1323 = vcombine.high %v1299, 0.0
  %v1324 = vcombine.high %v1306, 0.0
  %v1325 = vcombine.high %v1315, 0.0
  %v1326 = vcombine.high %v1322, 0.0
  %v1327 = vcombine.low %v1299, %v1306
  %v1329 = vunpack.c.l.s4 1983009808
  %v1330 = vunpack.c.0.s8 %v1329
  %v1331 = vlaneseq
  %v1332 = vshrl.u32 %v1331, 7
  %v1333 = vsub.s32 %v1330, %v1332
  %v1334 = vrot.slane %v1327, %v1333
  %v1335 = vcombine.low %v1323, %v1324
  %v1337 = vunpack.c.l.s4 1983009808
  %v1338 = vunpack.c.0.s8 %v1337
  %v1339 = vlaneseq
  %v1340 = vshrl.u32 %v1339, 7
  %v1341 = vsub.s32 %v1338, %v1340
  %v1342 = vrot.slane %v1335, %v1341
  %v1343 = vcombine.low %v1315, %v1322
  %v1345 = vunpack.c.l.s4 1983009808
  %v1346 = vunpack.c.0.s8 %v1345
  %v1347 = vlaneseq
  %v1348 = vshrl.u32 %v1347, 7
  %v1349 = vsub.s32 %v1346, %v1348
  %v1350 = vrot.slane %v1343, %v1349
  %v1351 = vcombine.low %v1325, %v1326
  %v1353 = vunpack.c.l.s4 1983009808
  %v1354 = vunpack.c.0.s8 %v1353
  %v1355 = vlaneseq
  %v1356 = vshrl.u32 %v1355, 7
  %v1357 = vsub.s32 %v1354, %v1356
  %v1358 = vrot.slane %v1351, %v1357
  %v1359 = vcombine.low %v1334, %v1342
  %v1360 = vcombine.high %v1334, %v1342
  %v1362 = vunpack.c.l.s4 1934713408
  %v1363 = vunpack.c.0.s8 %v1362
  %v1364 = vlaneseq
  %v1365 = vshrl.u32 %v1364, 7
  %v1366 = vsub.s32 %v1363, %v1365
  %v1367 = vrot.slane %v1359, %v1366
  %v1369 = vunpack.c.l.s4 1934713408
  %v1370 = vunpack.c.0.s8 %v1369
  %v1371 = vlaneseq
  %v1372 = vshrl.u32 %v1371, 7
  %v1373 = vsub.s32 %v1370, %v1372
  %v1374 = vrot.slane %v1360, %v1373
  %v1375 = vcombine.low %v1350, %v1358
  %v1376 = vcombine.high %v1350, %v1358
  %v1378 = vunpack.c.l.s4 1934713408
  %v1379 = vunpack.c.0.s8 %v1378
  %v1380 = vlaneseq
  %v1381 = vshrl.u32 %v1380, 7
  %v1382 = vsub.s32 %v1379, %v1381
  %v1383 = vrot.slane %v1375, %v1382
  %v1385 = vunpack.c.l.s4 1934713408
  %v1386 = vunpack.c.0.s8 %v1385
  %v1387 = vlaneseq
  %v1388 = vshrl.u32 %v1387, 7
  %v1389 = vsub.s32 %v1386, %v1388
  %v1390 = vrot.slane %v1376, %v1389
  %v1391 = vcombine.low %v1367, %v1383
  %v1392 = vcombine.high %v1367, %v1383
  %v1393 = vcombine.low %v1374, %v1390
  %v1394 = vcombine.high %v1374, %v1390
  %1396 = vrot.lane.b32.xlu0 %v1392, 8
  %v1397 = vpop.permute.xlu0 %1396
  %1400 = vrot.lane.b32.xlu0 %v1393, 16
  %v1401 = vpop.permute.xlu0 %1400
  %1404 = vrot.lane.b32.xlu0 %v1394, 24
  %v1405 = vpop.permute.xlu0 %1404
  %v1407 = vsel %vm600, %v1391, %v1397
  %vm1408 = vcmask 130048
  %v1409 = vsel %vm1408, %v1407, %v1401
  %vm1410 = vcmask 195584
  %v1411 = vsel %vm1410, %v1409, %v1405
  %1413 = vrot.lane.b32.xlu0 %v279, 120
  %v1414 = vpop.permute.xlu0 %1413
  %1416 = vrot.lane.b32.xlu0 %v279, 112
  %v1417 = vpop.permute.xlu0 %1416
  %1419 = vrot.lane.b32.xlu0 %v279, 104
  %v1420 = vpop.permute.xlu0 %1419
  %v1422 = vcombine.low %v279, %v1417
  %v1423 = vcombine.high %v279, %v1417
  %v1425 = vunpack.c.l.s4 1983009808
  %v1426 = vunpack.c.0.s8 %v1425
  %v1427 = vlaneseq
  %v1428 = vshrl.u32 %v1427, 7
  %v1429 = vsub.s32 %v1426, %v1428
  %v1430 = vrot.slane %v1422, %v1429
  %v1432 = vunpack.c.l.s4 1983009808
  %v1433 = vunpack.c.0.s8 %v1432
  %v1434 = vlaneseq
  %v1435 = vshrl.u32 %v1434, 7
  %v1436 = vsub.s32 %v1433, %v1435
  %v1437 = vrot.slane %v1423, %v1436
  %v1438 = vcombine.low %v1414, %v1420
  %v1439 = vcombine.high %v1414, %v1420
  %v1441 = vunpack.c.l.s4 1983009808
  %v1442 = vunpack.c.0.s8 %v1441
  %v1443 = vlaneseq
  %v1444 = vshrl.u32 %v1443, 7
  %v1445 = vsub.s32 %v1442, %v1444
  %v1446 = vrot.slane %v1438, %v1445
  %v1448 = vunpack.c.l.s4 1983009808
  %v1449 = vunpack.c.0.s8 %v1448
  %v1450 = vlaneseq
  %v1451 = vshrl.u32 %v1450, 7
  %v1452 = vsub.s32 %v1449, %v1451
  %v1453 = vrot.slane %v1439, %v1452
  %v1454 = vcombine.low %v1430, %v1446
  %v1455 = vcombine.high %v1430, %v1446
  %v1457 = vunpack.c.l.s4 1934713408
  %v1458 = vunpack.c.0.s8 %v1457
  %v1459 = vlaneseq
  %v1460 = vshrl.u32 %v1459, 7
  %v1461 = vsub.s32 %v1458, %v1460
  %v1462 = vrot.slane %v1454, %v1461
  %v1464 = vunpack.c.l.s4 1934713408
  %v1465 = vunpack.c.0.s8 %v1464
  %v1466 = vlaneseq
  %v1467 = vshrl.u32 %v1466, 7
  %v1468 = vsub.s32 %v1465, %v1467
  %v1469 = vrot.slane %v1455, %v1468
  %v1470 = vcombine.low %v1437, %v1453
  %v1471 = vcombine.high %v1437, %v1453
  %v1473 = vunpack.c.l.s4 1934713408
  %v1474 = vunpack.c.0.s8 %v1473
  %v1475 = vlaneseq
  %v1476 = vshrl.u32 %v1475, 7
  %v1477 = vsub.s32 %v1474, %v1476
  %v1478 = vrot.slane %v1470, %v1477
  %v1480 = vunpack.c.l.s4 1934713408
  %v1481 = vunpack.c.0.s8 %v1480
  %v1482 = vlaneseq
  %v1483 = vshrl.u32 %v1482, 7
  %v1484 = vsub.s32 %v1481, %v1483
  %v1485 = vrot.slane %v1471, %v1484
  %v1486 = vcombine.high %v1462, 0.0
  %v1487 = vcombine.high %v1469, 0.0
  %v1488 = vcombine.high %v1478, 0.0
  %v1489 = vcombine.high %v1485, 0.0
  %v1490 = vcombine.low %v1462, %v1469
  %v1492 = vunpack.c.l.s4 1983009808
  %v1493 = vunpack.c.0.s8 %v1492
  %v1494 = vlaneseq
  %v1495 = vshrl.u32 %v1494, 7
  %v1496 = vsub.s32 %v1493, %v1495
  %v1497 = vrot.slane %v1490, %v1496
  %v1498 = vcombine.low %v1486, %v1487
  %v1500 = vunpack.c.l.s4 1983009808
  %v1501 = vunpack.c.0.s8 %v1500
  %v1502 = vlaneseq
  %v1503 = vshrl.u32 %v1502, 7
  %v1504 = vsub.s32 %v1501, %v1503
  %v1505 = vrot.slane %v1498, %v1504
  %v1506 = vcombine.low %v1478, %v1485
  %v1508 = vunpack.c.l.s4 1983009808
  %v1509 = vunpack.c.0.s8 %v1508
  %v1510 = vlaneseq
  %v1511 = vshrl.u32 %v1510, 7
  %v1512 = vsub.s32 %v1509, %v1511
  %v1513 = vrot.slane %v1506, %v1512
  %v1514 = vcombine.low %v1488, %v1489
  %v1516 = vunpack.c.l.s4 1983009808
  %v1517 = vunpack.c.0.s8 %v1516
  %v1518 = vlaneseq
  %v1519 = vshrl.u32 %v1518, 7
  %v1520 = vsub.s32 %v1517, %v1519
  %v1521 = vrot.slane %v1514, %v1520
  %v1522 = vcombine.low %v1497, %v1505
  %v1523 = vcombine.high %v1497, %v1505
  %v1525 = vunpack.c.l.s4 1934713408
  %v1526 = vunpack.c.0.s8 %v1525
  %v1527 = vlaneseq
  %v1528 = vshrl.u32 %v1527, 7
  %v1529 = vsub.s32 %v1526, %v1528
  %v1530 = vrot.slane %v1522, %v1529
  %v1532 = vunpack.c.l.s4 1934713408
  %v1533 = vunpack.c.0.s8 %v1532
  %v1534 = vlaneseq
  %v1535 = vshrl.u32 %v1534, 7
  %v1536 = vsub.s32 %v1533, %v1535
  %v1537 = vrot.slane %v1523, %v1536
  %v1538 = vcombine.low %v1513, %v1521
  %v1539 = vcombine.high %v1513, %v1521
  %v1541 = vunpack.c.l.s4 1934713408
  %v1542 = vunpack.c.0.s8 %v1541
  %v1543 = vlaneseq
  %v1544 = vshrl.u32 %v1543, 7
  %v1545 = vsub.s32 %v1542, %v1544
  %v1546 = vrot.slane %v1538, %v1545
  %v1548 = vunpack.c.l.s4 1934713408
  %v1549 = vunpack.c.0.s8 %v1548
  %v1550 = vlaneseq
  %v1551 = vshrl.u32 %v1550, 7
  %v1552 = vsub.s32 %v1549, %v1551
  %v1553 = vrot.slane %v1539, %v1552
  %v1554 = vcombine.low %v1530, %v1546
  %v1555 = vcombine.high %v1530, %v1546
  %v1556 = vcombine.low %v1537, %v1553
  %v1557 = vcombine.high %v1537, %v1553
  %v1558 = vrot.slane %v284, 4
  %v1559 = vrot.slane %v435, 4
  %v1560 = vrot.slane %v437, 4
  %v1561 = vrot.slane %v439, 4
  %1562 = vrot.lane.b32.xlu0 %v1558, 96
  %v1563 = vpop.permute.xlu0 %1562
  %1564 = vrot.lane.b32.xlu0 %v1559, 96
  %v1565 = vpop.permute.xlu0 %1564
  %1566 = vrot.lane.b32.xlu0 %v1560, 96
  %v1567 = vpop.permute.xlu0 %1566
  %1568 = vrot.lane.b32.xlu0 %v1561, 96
  %v1569 = vpop.permute.xlu0 %1568
  %v1574 = vcombine.low %v1563, %v1567
  %v1576 = vunpack.c.l.s4 1983009808
  %v1577 = vunpack.c.0.s8 %v1576
  %v1578 = vlaneseq
  %v1579 = vshrl.u32 %v1578, 7
  %v1580 = vsub.s32 %v1577, %v1579
  %v1581 = vrot.slane %v1574, %v1580
  %v1582 = vcombine.low %v1565, %v1569
  %v1584 = vunpack.c.l.s4 1983009808
  %v1585 = vunpack.c.0.s8 %v1584
  %v1586 = vlaneseq
  %v1587 = vshrl.u32 %v1586, 7
  %v1588 = vsub.s32 %v1585, %v1587
  %v1589 = vrot.slane %v1582, %v1588
  %v1590 = vcombine.low %v1581, %v1589
  %v1591 = vcombine.high %v1581, %v1589
  %v1593 = vunpack.c.l.s4 1934713408
  %v1594 = vunpack.c.0.s8 %v1593
  %v1595 = vlaneseq
  %v1596 = vshrl.u32 %v1595, 7
  %v1597 = vsub.s32 %v1594, %v1596
  %v1598 = vrot.slane %v1590, %v1597
  %v1600 = vunpack.c.l.s4 1934713408
  %v1601 = vunpack.c.0.s8 %v1600
  %v1602 = vlaneseq
  %v1603 = vshrl.u32 %v1602, 7
  %v1604 = vsub.s32 %v1601, %v1603
  %v1605 = vrot.slane %v1591, %v1604
  %v1606 = vcombine.high %v1598, 0.0
  %v1607 = vcombine.high %v1605, 0.0
  %v1608 = vcombine.low %v1598, %v1605
  %v1610 = vunpack.c.l.s4 1983009808
  %v1611 = vunpack.c.0.s8 %v1610
  %v1612 = vlaneseq
  %v1613 = vshrl.u32 %v1612, 7
  %v1614 = vsub.s32 %v1611, %v1613
  %v1615 = vrot.slane %v1608, %v1614
  %v1616 = vcombine.low %v1606, %v1607
  %v1618 = vunpack.c.l.s4 1983009808
  %v1619 = vunpack.c.0.s8 %v1618
  %v1620 = vlaneseq
  %v1621 = vshrl.u32 %v1620, 7
  %v1622 = vsub.s32 %v1619, %v1621
  %v1623 = vrot.slane %v1616, %v1622
  %v1624 = vcombine.low %v1615, %v1623
  %v1625 = vcombine.high %v1615, %v1623
  %v1627 = vunpack.c.l.s4 1934713408
  %v1628 = vunpack.c.0.s8 %v1627
  %v1629 = vlaneseq
  %v1630 = vshrl.u32 %v1629, 7
  %v1631 = vsub.s32 %v1628, %v1630
  %v1632 = vrot.slane %v1624, %v1631
  %v1634 = vunpack.c.l.s4 1934713408
  %v1635 = vunpack.c.0.s8 %v1634
  %v1636 = vlaneseq
  %v1637 = vshrl.u32 %v1636, 7
  %v1638 = vsub.s32 %v1635, %v1637
  %v1639 = vrot.slane %v1625, %v1638
  %v1640 = vcombine.high %v1632, 0.0
  %v1641 = vcombine.high %v1639, 0.0
  %1642 = vrot.lane.b32.xlu0 %v1558, 64
  %v1643 = vpop.permute.xlu0 %1642
  %1644 = vrot.lane.b32.xlu0 %v1559, 64
  %v1645 = vpop.permute.xlu0 %1644
  %1646 = vrot.lane.b32.xlu0 %v1560, 64
  %v1647 = vpop.permute.xlu0 %1646
  %1648 = vrot.lane.b32.xlu0 %v1561, 64
  %v1649 = vpop.permute.xlu0 %1648
  %v1654 = vcombine.low %v1643, %v1647
  %v1656 = vunpack.c.l.s4 1983009808
  %v1657 = vunpack.c.0.s8 %v1656
  %v1658 = vlaneseq
  %v1659 = vshrl.u32 %v1658, 7
  %v1660 = vsub.s32 %v1657, %v1659
  %v1661 = vrot.slane %v1654, %v1660
  %v1662 = vcombine.low %v1645, %v1649
  %v1664 = vunpack.c.l.s4 1983009808
  %v1665 = vunpack.c.0.s8 %v1664
  %v1666 = vlaneseq
  %v1667 = vshrl.u32 %v1666, 7
  %v1668 = vsub.s32 %v1665, %v1667
  %v1669 = vrot.slane %v1662, %v1668
  %v1670 = vcombine.low %v1661, %v1669
  %v1671 = vcombine.high %v1661, %v1669
  %v1673 = vunpack.c.l.s4 1934713408
  %v1674 = vunpack.c.0.s8 %v1673
  %v1675 = vlaneseq
  %v1676 = vshrl.u32 %v1675, 7
  %v1677 = vsub.s32 %v1674, %v1676
  %v1678 = vrot.slane %v1670, %v1677
  %v1680 = vunpack.c.l.s4 1934713408
  %v1681 = vunpack.c.0.s8 %v1680
  %v1682 = vlaneseq
  %v1683 = vshrl.u32 %v1682, 7
  %v1684 = vsub.s32 %v1681, %v1683
  %v1685 = vrot.slane %v1671, %v1684
  %v1686 = vcombine.high %v1678, 0.0
  %v1687 = vcombine.high %v1685, 0.0
  %v1688 = vcombine.low %v1678, %v1685
  %v1690 = vunpack.c.l.s4 1983009808
  %v1691 = vunpack.c.0.s8 %v1690
  %v1692 = vlaneseq
  %v1693 = vshrl.u32 %v1692, 7
  %v1694 = vsub.s32 %v1691, %v1693
  %v1695 = vrot.slane %v1688, %v1694
  %v1696 = vcombine.low %v1686, %v1687
  %v1698 = vunpack.c.l.s4 1983009808
  %v1699 = vunpack.c.0.s8 %v1698
  %v1700 = vlaneseq
  %v1701 = vshrl.u32 %v1700, 7
  %v1702 = vsub.s32 %v1699, %v1701
  %v1703 = vrot.slane %v1696, %v1702
  %v1704 = vcombine.low %v1695, %v1703
  %v1705 = vcombine.high %v1695, %v1703
  %v1707 = vunpack.c.l.s4 1934713408
  %v1708 = vunpack.c.0.s8 %v1707
  %v1709 = vlaneseq
  %v1710 = vshrl.u32 %v1709, 7
  %v1711 = vsub.s32 %v1708, %v1710
  %v1712 = vrot.slane %v1704, %v1711
  %v1714 = vunpack.c.l.s4 1934713408
  %v1715 = vunpack.c.0.s8 %v1714
  %v1716 = vlaneseq
  %v1717 = vshrl.u32 %v1716, 7
  %v1718 = vsub.s32 %v1715, %v1717
  %v1719 = vrot.slane %v1705, %v1718
  %v1720 = vcombine.high %v1712, 0.0
  %v1721 = vcombine.high %v1719, 0.0
  %v1723 = vsel %vm600, %v1554, 0
  %v1726 = vsel %vm600, %v1632, 0
  %1728 = vmatprep.subr.mxu0 0.0
  %1729 = vmatpush1.xpose.msra.mxu0 %v1726
  %1730 = vmatprep.subr.mxu0 0.0
  %1731 = vmatpush1.xpose.msra.mxu0 0.0
  %1732 = vmatprep.subr.mxu0 0.0
  %1733 = vmatpush1.xpose.msra.mxu0 0.0
  %1734 = vmatprep.subr.mxu0 0.0
  %1735 = vmatpush1.xpose.msra.mxu0 0.0
  %1736 = vmatprep.subr.mxu0 0.0
  %1737 = vmatpush1.xpose.msra.mxu0 0.0
  %1738 = vmatprep.subr.mxu0 0.0
  %1739 = vmatpush1.xpose.msra.mxu0 0.0
  %1740 = vmatprep.subr.mxu0 0.0
  %1741 = vmatpush1.xpose.msra.mxu0 0.0
  %1742 = vmatprep.subr.mxu0 0.0
  %1743 = vmatpush1.xpose.msra.mxu0 0.0
  %1744 = vmatprep.subr.mxu0 0.0
  %1745 = vmatpush1.xpose.msra.mxu0 0.0
  %1746 = vmatprep.subr.mxu0 0.0
  %1747 = vmatpush1.xpose.msra.mxu0 0.0
  %1748 = vmatprep.subr.mxu0 0.0
  %1749 = vmatpush1.xpose.msra.mxu0 0.0
  %1750 = vmatprep.subr.mxu0 0.0
  %1751 = vmatpush1.xpose.msra.mxu0 0.0
  %1752 = vmatprep.subr.mxu0 0.0
  %1753 = vmatpush1.xpose.msra.mxu0 0.0
  %1754 = vmatprep.subr.mxu0 0.0
  %1755 = vmatpush1.xpose.msra.mxu0 0.0
  %1756 = vmatprep.subr.mxu0 0.0
  %1757 = vmatpush1.xpose.msra.mxu0 0.0
  %1758 = vmatprep.subr.mxu0 0.0
  %1759 = vmatpush1.xpose.msra.mxu0 0.0
  %1760 = vmatprep.subr.mxu0 0.0
  %1761 = vmatpush1.xpose.msra.mxu0 0.0
  %1762 = vmatprep.subr.mxu0 0.0
  %1763 = vmatpush1.xpose.msra.mxu0 0.0
  %1764 = vmatprep.subr.mxu0 0.0
  %1765 = vmatpush1.xpose.msra.mxu0 0.0
  %1766 = vmatprep.subr.mxu0 0.0
  %1767 = vmatpush1.xpose.msra.mxu0 0.0
  %1768 = vmatprep.subr.mxu0 0.0
  %1769 = vmatpush1.xpose.msra.mxu0 0.0
  %1770 = vmatprep.subr.mxu0 0.0
  %1771 = vmatpush1.xpose.msra.mxu0 0.0
  %1772 = vmatprep.subr.mxu0 0.0
  %1773 = vmatpush1.xpose.msra.mxu0 0.0
  %1774 = vmatprep.subr.mxu0 0.0
  %1775 = vmatpush1.xpose.msra.mxu0 0.0
  %1776 = vmatprep.subr.mxu0 0.0
  %1777 = vmatpush1.xpose.msra.mxu0 0.0
  %1778 = vmatprep.subr.mxu0 0.0
  %1779 = vmatpush1.xpose.msra.mxu0 0.0
  %1780 = vmatprep.subr.mxu0 0.0
  %1781 = vmatpush1.xpose.msra.mxu0 0.0
  %1782 = vmatprep.subr.mxu0 0.0
  %1783 = vmatpush1.xpose.msra.mxu0 0.0
  %1784 = vmatprep.subr.mxu0 0.0
  %1785 = vmatpush1.xpose.msra.mxu0 0.0
  %1786 = vmatprep.subr.mxu0 0.0
  %1787 = vmatpush1.xpose.msra.mxu0 0.0
  %1788 = vmatprep.subr.mxu0 0.0
  %1789 = vmatpush1.xpose.msra.mxu0 0.0
  %1790 = vmatprep.subr.mxu0 0.0
  %1791 = vmatpush1.xpose.msra.mxu0 0.0
  %1792 = vmatprep.mubr.f32.mxu0 0.0
  %1793 = vmatmul.mubr.f32.gmra.mrb[0].mxu0 %v1723
  %v1794 = vpop.f32.mrb[0].mxu0
  %v1795 = vadd.f32 0.0, %v1794
  %v1796 = vpop.f32.mrb[0].mxu0
  %1797 = vdwg.mxu0
  %v1799 = vsel %vm600, %v1555, 0
  %v1802 = vsel %vm600, %v1640, 0
  %1804 = vmatprep.subr.mxu0 0.0
  %1805 = vmatpush1.xpose.msra.mxu0 %v1802
  %1806 = vmatprep.subr.mxu0 0.0
  %1807 = vmatpush1.xpose.msra.mxu0 0.0
  %1808 = vmatprep.subr.mxu0 0.0
  %1809 = vmatpush1.xpose.msra.mxu0 0.0
  %1810 = vmatprep.subr.mxu0 0.0
  %1811 = vmatpush1.xpose.msra.mxu0 0.0
  %1812 = vmatprep.subr.mxu0 0.0
  %1813 = vmatpush1.xpose.msra.mxu0 0.0
  %1814 = vmatprep.subr.mxu0 0.0
  %1815 = vmatpush1.xpose.msra.mxu0 0.0
  %1816 = vmatprep.subr.mxu0 0.0
  %1817 = vmatpush1.xpose.msra.mxu0 0.0
  %1818 = vmatprep.subr.mxu0 0.0
  %1819 = vmatpush1.xpose.msra.mxu0 0.0
  %1820 = vmatprep.subr.mxu0 0.0
  %1821 = vmatpush1.xpose.msra.mxu0 0.0
  %1822 = vmatprep.subr.mxu0 0.0
  %1823 = vmatpush1.xpose.msra.mxu0 0.0
  %1824 = vmatprep.subr.mxu0 0.0
  %1825 = vmatpush1.xpose.msra.mxu0 0.0
  %1826 = vmatprep.subr.mxu0 0.0
  %1827 = vmatpush1.xpose.msra.mxu0 0.0
  %1828 = vmatprep.subr.mxu0 0.0
  %1829 = vmatpush1.xpose.msra.mxu0 0.0
  %1830 = vmatprep.subr.mxu0 0.0
  %1831 = vmatpush1.xpose.msra.mxu0 0.0
  %1832 = vmatprep.subr.mxu0 0.0
  %1833 = vmatpush1.xpose.msra.mxu0 0.0
  %1834 = vmatprep.subr.mxu0 0.0
  %1835 = vmatpush1.xpose.msra.mxu0 0.0
  %1836 = vmatprep.subr.mxu0 0.0
  %1837 = vmatpush1.xpose.msra.mxu0 0.0
  %1838 = vmatprep.subr.mxu0 0.0
  %1839 = vmatpush1.xpose.msra.mxu0 0.0
  %1840 = vmatprep.subr.mxu0 0.0
  %1841 = vmatpush1.xpose.msra.mxu0 0.0
  %1842 = vmatprep.subr.mxu0 0.0
  %1843 = vmatpush1.xpose.msra.mxu0 0.0
  %1844 = vmatprep.subr.mxu0 0.0
  %1845 = vmatpush1.xpose.msra.mxu0 0.0
  %1846 = vmatprep.subr.mxu0 0.0
  %1847 = vmatpush1.xpose.msra.mxu0 0.0
  %1848 = vmatprep.subr.mxu0 0.0
  %1849 = vmatpush1.xpose.msra.mxu0 0.0
  %1850 = vmatprep.subr.mxu0 0.0
  %1851 = vmatpush1.xpose.msra.mxu0 0.0
  %1852 = vmatprep.subr.mxu0 0.0
  %1853 = vmatpush1.xpose.msra.mxu0 0.0
  %1854 = vmatprep.subr.mxu0 0.0
  %1855 = vmatpush1.xpose.msra.mxu0 0.0
  %1856 = vmatprep.subr.mxu0 0.0
  %1857 = vmatpush1.xpose.msra.mxu0 0.0
  %1858 = vmatprep.subr.mxu0 0.0
  %1859 = vmatpush1.xpose.msra.mxu0 0.0
  %1860 = vmatprep.subr.mxu0 0.0
  %1861 = vmatpush1.xpose.msra.mxu0 0.0
  %1862 = vmatprep.subr.mxu0 0.0
  %1863 = vmatpush1.xpose.msra.mxu0 0.0
  %1864 = vmatprep.subr.mxu0 0.0
  %1865 = vmatpush1.xpose.msra.mxu0 0.0
  %1866 = vmatprep.subr.mxu0 0.0
  %1867 = vmatpush1.xpose.msra.mxu0 0.0
  %1868 = vmatprep.mubr.f32.mxu0 0.0
  %1869 = vmatmul.mubr.f32.gmra.mrb[0].mxu0 %v1799
  %v1870 = vpop.f32.mrb[0].mxu0
  %v1871 = vadd.f32 0.0, %v1870
  %v1872 = vpop.f32.mrb[0].mxu0
  %1873 = vdwg.mxu0
  %v1875 = vsel %vm600, %v1556, 0
  %v1878 = vsel %vm600, %v1639, 0
  %1880 = vmatprep.subr.mxu0 0.0
  %1881 = vmatpush1.xpose.msra.mxu0 %v1878
  %1882 = vmatprep.subr.mxu0 0.0
  %1883 = vmatpush1.xpose.msra.mxu0 0.0
  %1884 = vmatprep.subr.mxu0 0.0
  %1885 = vmatpush1.xpose.msra.mxu0 0.0
  %1886 = vmatprep.subr.mxu0 0.0
  %1887 = vmatpush1.xpose.msra.mxu0 0.0
  %1888 = vmatprep.subr.mxu0 0.0
  %1889 = vmatpush1.xpose.msra.mxu0 0.0
  %1890 = vmatprep.subr.mxu0 0.0
  %1891 = vmatpush1.xpose.msra.mxu0 0.0
  %1892 = vmatprep.subr.mxu0 0.0
  %1893 = vmatpush1.xpose.msra.mxu0 0.0
  %1894 = vmatprep.subr.mxu0 0.0
  %1895 = vmatpush1.xpose.msra.mxu0 0.0
  %1896 = vmatprep.subr.mxu0 0.0
  %1897 = vmatpush1.xpose.msra.mxu0 0.0
  %1898 = vmatprep.subr.mxu0 0.0
  %1899 = vmatpush1.xpose.msra.mxu0 0.0
  %1900 = vmatprep.subr.mxu0 0.0
  %1901 = vmatpush1.xpose.msra.mxu0 0.0
  %1902 = vmatprep.subr.mxu0 0.0
  %1903 = vmatpush1.xpose.msra.mxu0 0.0
  %1904 = vmatprep.subr.mxu0 0.0
  %1905 = vmatpush1.xpose.msra.mxu0 0.0
  %1906 = vmatprep.subr.mxu0 0.0
  %1907 = vmatpush1.xpose.msra.mxu0 0.0
  %1908 = vmatprep.subr.mxu0 0.0
  %1909 = vmatpush1.xpose.msra.mxu0 0.0
  %1910 = vmatprep.subr.mxu0 0.0
  %1911 = vmatpush1.xpose.msra.mxu0 0.0
  %1912 = vmatprep.subr.mxu0 0.0
  %1913 = vmatpush1.xpose.msra.mxu0 0.0
  %1914 = vmatprep.subr.mxu0 0.0
  %1915 = vmatpush1.xpose.msra.mxu0 0.0
  %1916 = vmatprep.subr.mxu0 0.0
  %1917 = vmatpush1.xpose.msra.mxu0 0.0
  %1918 = vmatprep.subr.mxu0 0.0
  %1919 = vmatpush1.xpose.msra.mxu0 0.0
  %1920 = vmatprep.subr.mxu0 0.0
  %1921 = vmatpush1.xpose.msra.mxu0 0.0
  %1922 = vmatprep.subr.mxu0 0.0
  %1923 = vmatpush1.xpose.msra.mxu0 0.0
  %1924 = vmatprep.subr.mxu0 0.0
  %1925 = vmatpush1.xpose.msra.mxu0 0.0
  %1926 = vmatprep.subr.mxu0 0.0
  %1927 = vmatpush1.xpose.msra.mxu0 0.0
  %1928 = vmatprep.subr.mxu0 0.0
  %1929 = vmatpush1.xpose.msra.mxu0 0.0
  %1930 = vmatprep.subr.mxu0 0.0
  %1931 = vmatpush1.xpose.msra.mxu0 0.0
  %1932 = vmatprep.subr.mxu0 0.0
  %1933 = vmatpush1.xpose.msra.mxu0 0.0
  %1934 = vmatprep.subr.mxu0 0.0
  %1935 = vmatpush1.xpose.msra.mxu0 0.0
  %1936 = vmatprep.subr.mxu0 0.0
  %1937 = vmatpush1.xpose.msra.mxu0 0.0
  %1938 = vmatprep.subr.mxu0 0.0
  %1939 = vmatpush1.xpose.msra.mxu0 0.0
  %1940 = vmatprep.subr.mxu0 0.0
  %1941 = vmatpush1.xpose.msra.mxu0 0.0
  %1942 = vmatprep.subr.mxu0 0.0
  %1943 = vmatpush1.xpose.msra.mxu0 0.0
  %1944 = vmatprep.mubr.f32.mxu0 0.0
  %1945 = vmatmul.mubr.f32.gmra.mrb[0].mxu0 %v1875
  %v1946 = vpop.f32.mrb[0].mxu0
  %v1947 = vadd.f32 0.0, %v1946
  %v1948 = vpop.f32.mrb[0].mxu0
  %1949 = vdwg.mxu0
  %v1951 = vsel %vm600, %v1557, 0
  %v1954 = vsel %vm600, %v1641, 0
  %1956 = vmatprep.subr.mxu0 0.0
  %1957 = vmatpush1.xpose.msra.mxu0 %v1954
  %1958 = vmatprep.subr.mxu0 0.0
  %1959 = vmatpush1.xpose.msra.mxu0 0.0
  %1960 = vmatprep.subr.mxu0 0.0
  %1961 = vmatpush1.xpose.msra.mxu0 0.0
  %1962 = vmatprep.subr.mxu0 0.0
  %1963 = vmatpush1.xpose.msra.mxu0 0.0
  %1964 = vmatprep.subr.mxu0 0.0
  %1965 = vmatpush1.xpose.msra.mxu0 0.0
  %1966 = vmatprep.subr.mxu0 0.0
  %1967 = vmatpush1.xpose.msra.mxu0 0.0
  %1968 = vmatprep.subr.mxu0 0.0
  %1969 = vmatpush1.xpose.msra.mxu0 0.0
  %1970 = vmatprep.subr.mxu0 0.0
  %1971 = vmatpush1.xpose.msra.mxu0 0.0
  %1972 = vmatprep.subr.mxu0 0.0
  %1973 = vmatpush1.xpose.msra.mxu0 0.0
  %1974 = vmatprep.subr.mxu0 0.0
  %1975 = vmatpush1.xpose.msra.mxu0 0.0
  %1976 = vmatprep.subr.mxu0 0.0
  %1977 = vmatpush1.xpose.msra.mxu0 0.0
  %1978 = vmatprep.subr.mxu0 0.0
  %1979 = vmatpush1.xpose.msra.mxu0 0.0
  %1980 = vmatprep.subr.mxu0 0.0
  %1981 = vmatpush1.xpose.msra.mxu0 0.0
  %1982 = vmatprep.subr.mxu0 0.0
  %1983 = vmatpush1.xpose.msra.mxu0 0.0
  %1984 = vmatprep.subr.mxu0 0.0
  %1985 = vmatpush1.xpose.msra.mxu0 0.0
  %1986 = vmatprep.subr.mxu0 0.0
  %1987 = vmatpush1.xpose.msra.mxu0 0.0
  %1988 = vmatprep.subr.mxu0 0.0
  %1989 = vmatpush1.xpose.msra.mxu0 0.0
  %1990 = vmatprep.subr.mxu0 0.0
  %1991 = vmatpush1.xpose.msra.mxu0 0.0
  %1992 = vmatprep.subr.mxu0 0.0
  %1993 = vmatpush1.xpose.msra.mxu0 0.0
  %1994 = vmatprep.subr.mxu0 0.0
  %1995 = vmatpush1.xpose.msra.mxu0 0.0
  %1996 = vmatprep.subr.mxu0 0.0
  %1997 = vmatpush1.xpose.msra.mxu0 0.0
  %1998 = vmatprep.subr.mxu0 0.0
  %1999 = vmatpush1.xpose.msra.mxu0 0.0
  %2000 = vmatprep.subr.mxu0 0.0
  %2001 = vmatpush1.xpose.msra.mxu0 0.0
  %2002 = vmatprep.subr.mxu0 0.0
  %2003 = vmatpush1.xpose.msra.mxu0 0.0
  %2004 = vmatprep.subr.mxu0 0.0
  %2005 = vmatpush1.xpose.msra.mxu0 0.0
  %2006 = vmatprep.subr.mxu0 0.0
  %2007 = vmatpush1.xpose.msra.mxu0 0.0
  %2008 = vmatprep.subr.mxu0 0.0
  %2009 = vmatpush1.xpose.msra.mxu0 0.0
  %2010 = vmatprep.subr.mxu0 0.0
  %2011 = vmatpush1.xpose.msra.mxu0 0.0
  %2012 = vmatprep.subr.mxu0 0.0
  %2013 = vmatpush1.xpose.msra.mxu0 0.0
  %2014 = vmatprep.subr.mxu0 0.0
  %2015 = vmatpush1.xpose.msra.mxu0 0.0
  %2016 = vmatprep.subr.mxu0 0.0
  %2017 = vmatpush1.xpose.msra.mxu0 0.0
  %2018 = vmatprep.subr.mxu0 0.0
  %2019 = vmatpush1.xpose.msra.mxu0 0.0
  %2020 = vmatprep.mubr.f32.mxu0 0.0
  %2021 = vmatmul.mubr.f32.gmra.mrb[0].mxu0 %v1951
  %v2022 = vpop.f32.mrb[0].mxu0
  %v2023 = vadd.f32 0.0, %v2022
  %v2024 = vpop.f32.mrb[0].mxu0
  %2025 = vdwg.mxu0
  %v2026 = vmul.f32 %v1795, 0.35355338
  %v2027 = vmul.f32 %v1871, 0.35355338
  %v2028 = vmul.f32 %v1947, 0.35355338
  %v2029 = vmul.f32 %v2023, 0.35355338
  %v2030 = vsel %vm909, %v2026, -inf
  %2031 = vmax.xlane.f32.xlu0 %v2030
  %v2032 = vpop.xlane.xlu0 %2031
  %v2033 = vsel %vm909, %v2027, -inf
  %2034 = vmax.xlane.f32.xlu0 %v2033
  %v2035 = vpop.xlane.xlu0 %2034
  %v2036 = vsel %vm909, %v2028, -inf
  %2037 = vmax.xlane.f32.xlu0 %v2036
  %v2038 = vpop.xlane.xlu0 %2037
  %v2039 = vsel %vm909, %v2029, -inf
  %2040 = vmax.xlane.f32.xlu0 %v2039
  %v2041 = vpop.xlane.xlu0 %2040
  %v2042 = vsub.f32 %v2026, %v2032
  %v2043 = vsub.f32 %v2027, %v2035
  %v2044 = vsub.f32 %v2028, %v2038
  %v2045 = vsub.f32 %v2029, %v2041
  %v2046 = vmul.f32 %v2042, 1.442695
  %v2047 = vpow.pop %v2046
  %v2048 = vmul.f32 %v2043, 1.442695
  %v2049 = vpow.pop %v2048
  %v2050 = vmul.f32 %v2044, 1.442695
  %v2051 = vpow.pop %v2050
  %v2052 = vmul.f32 %v2045, 1.442695
  %v2053 = vpow.pop %v2052
  %v2054 = vsel %vm909, %v2047, 0.0
  %2055 = vadd.xlane.f32.xlu0 %v2054
  %v2056 = vpop.xlane.xlu0 %2055
  %v2057 = vsel %vm909, %v2049, 0.0
  %2058 = vadd.xlane.f32.xlu0 %v2057
  %v2059 = vpop.xlane.xlu0 %2058
  %v2060 = vsel %vm909, %v2051, 0.0
  %2061 = vadd.xlane.f32.xlu0 %v2060
  %v2062 = vpop.xlane.xlu0 %2061
  %v2063 = vsel %vm909, %v2053, 0.0
  %2064 = vadd.xlane.f32.xlu0 %v2063
  %v2065 = vpop.xlane.xlu0 %2064
  %v2066 = vrcp.pop %v2056
  %v2067 = vrcp.pop %v2059
  %v2068 = vrcp.pop %v2062
  %v2069 = vrcp.pop %v2065
  %v2070 = vmul.f32 %v2047, %v2066
  %v2071 = vmul.f32 %v2049, %v2067
  %v2072 = vmul.f32 %v2051, %v2068
  %v2073 = vmul.f32 %v2053, %v2069
  %v2075 = vsel %vm909, %v2070, 0
  %v2078 = vsel %vm957, %v1712, 0
  %2080 = vmatprep.subr.mxu0 0.0
  %2081 = vmatpush1.msra.mxu0 %v2078
  %2082 = vmatprep.subr.mxu0 0.0
  %2083 = vmatpush1.msra.mxu0 0.0
  %2084 = vmatprep.subr.mxu0 0.0
  %2085 = vmatpush1.msra.mxu0 0.0
  %2086 = vmatprep.subr.mxu0 0.0
  %2087 = vmatpush1.msra.mxu0 0.0
  %2088 = vmatprep.subr.mxu0 0.0
  %2089 = vmatpush1.msra.mxu0 0.0
  %2090 = vmatprep.subr.mxu0 0.0
  %2091 = vmatpush1.msra.mxu0 0.0
  %2092 = vmatprep.subr.mxu0 0.0
  %2093 = vmatpush1.msra.mxu0 0.0
  %2094 = vmatprep.subr.mxu0 0.0
  %2095 = vmatpush1.msra.mxu0 0.0
  %2096 = vmatprep.subr.mxu0 0.0
  %2097 = vmatpush1.msra.mxu0 0.0
  %2098 = vmatprep.subr.mxu0 0.0
  %2099 = vmatpush1.msra.mxu0 0.0
  %2100 = vmatprep.subr.mxu0 0.0
  %2101 = vmatpush1.msra.mxu0 0.0
  %2102 = vmatprep.subr.mxu0 0.0
  %2103 = vmatpush1.msra.mxu0 0.0
  %2104 = vmatprep.subr.mxu0 0.0
  %2105 = vmatpush1.msra.mxu0 0.0
  %2106 = vmatprep.subr.mxu0 0.0
  %2107 = vmatpush1.msra.mxu0 0.0
  %2108 = vmatprep.subr.mxu0 0.0
  %2109 = vmatpush1.msra.mxu0 0.0
  %2110 = vmatprep.subr.mxu0 0.0
  %2111 = vmatpush1.msra.mxu0 0.0
  %2112 = vmatprep.subr.mxu0 0.0
  %2113 = vmatpush1.msra.mxu0 0.0
  %2114 = vmatprep.subr.mxu0 0.0
  %2115 = vmatpush1.msra.mxu0 0.0
  %2116 = vmatprep.subr.mxu0 0.0
  %2117 = vmatpush1.msra.mxu0 0.0
  %2118 = vmatprep.subr.mxu0 0.0
  %2119 = vmatpush1.msra.mxu0 0.0
  %2120 = vmatprep.subr.mxu0 0.0
  %2121 = vmatpush1.msra.mxu0 0.0
  %2122 = vmatprep.subr.mxu0 0.0
  %2123 = vmatpush1.msra.mxu0 0.0
  %2124 = vmatprep.subr.mxu0 0.0
  %2125 = vmatpush1.msra.mxu0 0.0
  %2126 = vmatprep.subr.mxu0 0.0
  %2127 = vmatpush1.msra.mxu0 0.0
  %2128 = vmatprep.subr.mxu0 0.0
  %2129 = vmatpush1.msra.mxu0 0.0
  %2130 = vmatprep.subr.mxu0 0.0
  %2131 = vmatpush1.msra.mxu0 0.0
  %2132 = vmatprep.subr.mxu0 0.0
  %2133 = vmatpush1.msra.mxu0 0.0
  %2134 = vmatprep.subr.mxu0 0.0
  %2135 = vmatpush1.msra.mxu0 0.0
  %2136 = vmatprep.subr.mxu0 0.0
  %2137 = vmatpush1.msra.mxu0 0.0
  %2138 = vmatprep.subr.mxu0 0.0
  %2139 = vmatpush1.msra.mxu0 0.0
  %2140 = vmatprep.subr.mxu0 0.0
  %2141 = vmatpush1.msra.mxu0 0.0
  %2142 = vmatprep.subr.mxu0 0.0
  %2143 = vmatpush1.msra.mxu0 0.0
  %2144 = vmatprep.mubr.f32.mxu0 0.0
  %2145 = vmatmul.mubr.f32.gmra.mrb[0].mxu0 %v2075
  %v2146 = vpop.f32.mrb[0].mxu0
  %v2147 = vadd.f32 0.0, %v2146
  %v2148 = vpop.f32.mrb[0].mxu0
  %2149 = vdwg.mxu0
  %v2151 = vsel %vm909, %v2071, 0
  %v2154 = vsel %vm957, %v1720, 0
  %2156 = vmatprep.subr.mxu0 0.0
  %2157 = vmatpush1.msra.mxu0 %v2154
  %2158 = vmatprep.subr.mxu0 0.0
  %2159 = vmatpush1.msra.mxu0 0.0
  %2160 = vmatprep.subr.mxu0 0.0
  %2161 = vmatpush1.msra.mxu0 0.0
  %2162 = vmatprep.subr.mxu0 0.0
  %2163 = vmatpush1.msra.mxu0 0.0
  %2164 = vmatprep.subr.mxu0 0.0
  %2165 = vmatpush1.msra.mxu0 0.0
  %2166 = vmatprep.subr.mxu0 0.0
  %2167 = vmatpush1.msra.mxu0 0.0
  %2168 = vmatprep.subr.mxu0 0.0
  %2169 = vmatpush1.msra.mxu0 0.0
  %2170 = vmatprep.subr.mxu0 0.0
  %2171 = vmatpush1.msra.mxu0 0.0
  %2172 = vmatprep.subr.mxu0 0.0
  %2173 = vmatpush1.msra.mxu0 0.0
  %2174 = vmatprep.subr.mxu0 0.0
  %2175 = vmatpush1.msra.mxu0 0.0
  %2176 = vmatprep.subr.mxu0 0.0
  %2177 = vmatpush1.msra.mxu0 0.0
  %2178 = vmatprep.subr.mxu0 0.0
  %2179 = vmatpush1.msra.mxu0 0.0
  %2180 = vmatprep.subr.mxu0 0.0
  %2181 = vmatpush1.msra.mxu0 0.0
  %2182 = vmatprep.subr.mxu0 0.0
  %2183 = vmatpush1.msra.mxu0 0.0
  %2184 = vmatprep.subr.mxu0 0.0
  %2185 = vmatpush1.msra.mxu0 0.0
  %2186 = vmatprep.subr.mxu0 0.0
  %2187 = vmatpush1.msra.mxu0 0.0
  %2188 = vmatprep.subr.mxu0 0.0
  %2189 = vmatpush1.msra.mxu0 0.0
  %2190 = vmatprep.subr.mxu0 0.0
  %2191 = vmatpush1.msra.mxu0 0.0
  %2192 = vmatprep.subr.mxu0 0.0
  %2193 = vmatpush1.msra.mxu0 0.0
  %2194 = vmatprep.subr.mxu0 0.0
  %2195 = vmatpush1.msra.mxu0 0.0
  %2196 = vmatprep.subr.mxu0 0.0
  %2197 = vmatpush1.msra.mxu0 0.0
  %2198 = vmatprep.subr.mxu0 0.0
  %2199 = vmatpush1.msra.mxu0 0.0
  %2200 = vmatprep.subr.mxu0 0.0
  %2201 = vmatpush1.msra.mxu0 0.0
  %2202 = vmatprep.subr.mxu0 0.0
  %2203 = vmatpush1.msra.mxu0 0.0
  %2204 = vmatprep.subr.mxu0 0.0
  %2205 = vmatpush1.msra.mxu0 0.0
  %2206 = vmatprep.subr.mxu0 0.0
  %2207 = vmatpush1.msra.mxu0 0.0
  %2208 = vmatprep.subr.mxu0 0.0
  %2209 = vmatpush1.msra.mxu0 0.0
  %2210 = vmatprep.subr.mxu0 0.0
  %2211 = vmatpush1.msra.mxu0 0.0
  %2212 = vmatprep.subr.mxu0 0.0
  %2213 = vmatpush1.msra.mxu0 0.0
  %2214 = vmatprep.subr.mxu0 0.0
  %2215 = vmatpush1.msra.mxu0 0.0
  %2216 = vmatprep.subr.mxu0 0.0
  %2217 = vmatpush1.msra.mxu0 0.0
  %2218 = vmatprep.subr.mxu0 0.0
  %2219 = vmatpush1.msra.mxu0 0.0
  %2220 = vmatprep.mubr.f32.mxu0 0.0
  %2221 = vmatmul.mubr.f32.gmra.mrb[0].mxu0 %v2151
  %v2222 = vpop.f32.mrb[0].mxu0
  %v2223 = vadd.f32 0.0, %v2222
  %v2224 = vpop.f32.mrb[0].mxu0
  %2225 = vdwg.mxu0
  %v2227 = vsel %vm909, %v2072, 0
  %v2230 = vsel %vm957, %v1719, 0
  %2232 = vmatprep.subr.mxu0 0.0
  %2233 = vmatpush1.msra.mxu0 %v2230
  %2234 = vmatprep.subr.mxu0 0.0
  %2235 = vmatpush1.msra.mxu0 0.0
  %2236 = vmatprep.subr.mxu0 0.0
  %2237 = vmatpush1.msra.mxu0 0.0
  %2238 = vmatprep.subr.mxu0 0.0
  %2239 = vmatpush1.msra.mxu0 0.0
  %2240 = vmatprep.subr.mxu0 0.0
  %2241 = vmatpush1.msra.mxu0 0.0
  %2242 = vmatprep.subr.mxu0 0.0
  %2243 = vmatpush1.msra.mxu0 0.0
  %2244 = vmatprep.subr.mxu0 0.0
  %2245 = vmatpush1.msra.mxu0 0.0
  %2246 = vmatprep.subr.mxu0 0.0
  %2247 = vmatpush1.msra.mxu0 0.0
  %2248 = vmatprep.subr.mxu0 0.0
  %2249 = vmatpush1.msra.mxu0 0.0
  %2250 = vmatprep.subr.mxu0 0.0
  %2251 = vmatpush1.msra.mxu0 0.0
  %2252 = vmatprep.subr.mxu0 0.0
  %2253 = vmatpush1.msra.mxu0 0.0
  %2254 = vmatprep.subr.mxu0 0.0
  %2255 = vmatpush1.msra.mxu0 0.0
  %2256 = vmatprep.subr.mxu0 0.0
  %2257 = vmatpush1.msra.mxu0 0.0
  %2258 = vmatprep.subr.mxu0 0.0
  %2259 = vmatpush1.msra.mxu0 0.0
  %2260 = vmatprep.subr.mxu0 0.0
  %2261 = vmatpush1.msra.mxu0 0.0
  %2262 = vmatprep.subr.mxu0 0.0
  %2263 = vmatpush1.msra.mxu0 0.0
  %2264 = vmatprep.subr.mxu0 0.0
  %2265 = vmatpush1.msra.mxu0 0.0
  %2266 = vmatprep.subr.mxu0 0.0
  %2267 = vmatpush1.msra.mxu0 0.0
  %2268 = vmatprep.subr.mxu0 0.0
  %2269 = vmatpush1.msra.mxu0 0.0
  %2270 = vmatprep.subr.mxu0 0.0
  %2271 = vmatpush1.msra.mxu0 0.0
  %2272 = vmatprep.subr.mxu0 0.0
  %2273 = vmatpush1.msra.mxu0 0.0
  %2274 = vmatprep.subr.mxu0 0.0
  %2275 = vmatpush1.msra.mxu0 0.0
  %2276 = vmatprep.subr.mxu0 0.0
  %2277 = vmatpush1.msra.mxu0 0.0
  %2278 = vmatprep.subr.mxu0 0.0
  %2279 = vmatpush1.msra.mxu0 0.0
  %2280 = vmatprep.subr.mxu0 0.0
  %2281 = vmatpush1.msra.mxu0 0.0
  %2282 = vmatprep.subr.mxu0 0.0
  %2283 = vmatpush1.msra.mxu0 0.0
  %2284 = vmatprep.subr.mxu0 0.0
  %2285 = vmatpush1.msra.mxu0 0.0
  %2286 = vmatprep.subr.mxu0 0.0
  %2287 = vmatpush1.msra.mxu0 0.0
  %2288 = vmatprep.subr.mxu0 0.0
  %2289 = vmatpush1.msra.mxu0 0.0
  %2290 = vmatprep.subr.mxu0 0.0
  %2291 = vmatpush1.msra.mxu0 0.0
  %2292 = vmatprep.subr.mxu0 0.0
  %2293 = vmatpush1.msra.mxu0 0.0
  %2294 = vmatprep.subr.mxu0 0.0
  %2295 = vmatpush1.msra.mxu0 0.0
  %2296 = vmatprep.mubr.f32.mxu0 0.0
  %2297 = vmatmul.mubr.f32.gmra.mrb[0].mxu0 %v2227
  %v2298 = vpop.f32.mrb[0].mxu0
  %v2299 = vadd.f32 0.0, %v2298
  %v2300 = vpop.f32.mrb[0].mxu0
  %2301 = vdwg.mxu0
  %v2303 = vsel %vm909, %v2073, 0
  %v2306 = vsel %vm957, %v1721, 0
  %2308 = vmatprep.subr.mxu0 0.0
  %2309 = vmatpush1.msra.mxu0 %v2306
  %2310 = vmatprep.subr.mxu0 0.0
  %2311 = vmatpush1.msra.mxu0 0.0
  %2312 = vmatprep.subr.mxu0 0.0
  %2313 = vmatpush1.msra.mxu0 0.0
  %2314 = vmatprep.subr.mxu0 0.0
  %2315 = vmatpush1.msra.mxu0 0.0
  %2316 = vmatprep.subr.mxu0 0.0
  %2317 = vmatpush1.msra.mxu0 0.0
  %2318 = vmatprep.subr.mxu0 0.0
  %2319 = vmatpush1.msra.mxu0 0.0
  %2320 = vmatprep.subr.mxu0 0.0
  %2321 = vmatpush1.msra.mxu0 0.0
  %2322 = vmatprep.subr.mxu0 0.0
  %2323 = vmatpush1.msra.mxu0 0.0
  %2324 = vmatprep.subr.mxu0 0.0
  %2325 = vmatpush1.msra.mxu0 0.0
  %2326 = vmatprep.subr.mxu0 0.0
  %2327 = vmatpush1.msra.mxu0 0.0
  %2328 = vmatprep.subr.mxu0 0.0
  %2329 = vmatpush1.msra.mxu0 0.0
  %2330 = vmatprep.subr.mxu0 0.0
  %2331 = vmatpush1.msra.mxu0 0.0
  %2332 = vmatprep.subr.mxu0 0.0
  %2333 = vmatpush1.msra.mxu0 0.0
  %2334 = vmatprep.subr.mxu0 0.0
  %2335 = vmatpush1.msra.mxu0 0.0
  %2336 = vmatprep.subr.mxu0 0.0
  %2337 = vmatpush1.msra.mxu0 0.0
  %2338 = vmatprep.subr.mxu0 0.0
  %2339 = vmatpush1.msra.mxu0 0.0
  %2340 = vmatprep.subr.mxu0 0.0
  %2341 = vmatpush1.msra.mxu0 0.0
  %2342 = vmatprep.subr.mxu0 0.0
  %2343 = vmatpush1.msra.mxu0 0.0
  %2344 = vmatprep.subr.mxu0 0.0
  %2345 = vmatpush1.msra.mxu0 0.0
  %2346 = vmatprep.subr.mxu0 0.0
  %2347 = vmatpush1.msra.mxu0 0.0
  %2348 = vmatprep.subr.mxu0 0.0
  %2349 = vmatpush1.msra.mxu0 0.0
  %2350 = vmatprep.subr.mxu0 0.0
  %2351 = vmatpush1.msra.mxu0 0.0
  %2352 = vmatprep.subr.mxu0 0.0
  %2353 = vmatpush1.msra.mxu0 0.0
  %2354 = vmatprep.subr.mxu0 0.0
  %2355 = vmatpush1.msra.mxu0 0.0
  %2356 = vmatprep.subr.mxu0 0.0
  %2357 = vmatpush1.msra.mxu0 0.0
  %2358 = vmatprep.subr.mxu0 0.0
  %2359 = vmatpush1.msra.mxu0 0.0
  %2360 = vmatprep.subr.mxu0 0.0
  %2361 = vmatpush1.msra.mxu0 0.0
  %2362 = vmatprep.subr.mxu0 0.0
  %2363 = vmatpush1.msra.mxu0 0.0
  %2364 = vmatprep.subr.mxu0 0.0
  %2365 = vmatpush1.msra.mxu0 0.0
  %2366 = vmatprep.subr.mxu0 0.0
  %2367 = vmatpush1.msra.mxu0 0.0
  %2368 = vmatprep.subr.mxu0 0.0
  %2369 = vmatpush1.msra.mxu0 0.0
  %2370 = vmatprep.subr.mxu0 0.0
  %2371 = vmatpush1.msra.mxu0 0.0
  %2372 = vmatprep.mubr.f32.mxu0 0.0
  %2373 = vmatmul.mubr.f32.gmra.mrb[0].mxu0 %v2303
  %v2374 = vpop.f32.mrb[0].mxu0
  %v2375 = vadd.f32 0.0, %v2374
  %v2376 = vpop.f32.mrb[0].mxu0
  %2377 = vdwg.mxu0
  %v2378 = vcombine.low %v2147, %v2299
  %v2379 = vcombine.high %v2147, %v2299
  %v2381 = vunpack.c.l.s4 1983009808
  %v2382 = vunpack.c.0.s8 %v2381
  %v2383 = vlaneseq
  %v2384 = vshrl.u32 %v2383, 7
  %v2385 = vsub.s32 %v2382, %v2384
  %v2386 = vrot.slane %v2378, %v2385
  %v2388 = vunpack.c.l.s4 1983009808
  %v2389 = vunpack.c.0.s8 %v2388
  %v2390 = vlaneseq
  %v2391 = vshrl.u32 %v2390, 7
  %v2392 = vsub.s32 %v2389, %v2391
  %v2393 = vrot.slane %v2379, %v2392
  %v2394 = vcombine.low %v2223, %v2375
  %v2395 = vcombine.high %v2223, %v2375
  %v2397 = vunpack.c.l.s4 1983009808
  %v2398 = vunpack.c.0.s8 %v2397
  %v2399 = vlaneseq
  %v2400 = vshrl.u32 %v2399, 7
  %v2401 = vsub.s32 %v2398, %v2400
  %v2402 = vrot.slane %v2394, %v2401
  %v2404 = vunpack.c.l.s4 1983009808
  %v2405 = vunpack.c.0.s8 %v2404
  %v2406 = vlaneseq
  %v2407 = vshrl.u32 %v2406, 7
  %v2408 = vsub.s32 %v2405, %v2407
  %v2409 = vrot.slane %v2395, %v2408
  %v2410 = vcombine.low %v2386, %v2402
  %v2411 = vcombine.high %v2386, %v2402
  %v2413 = vunpack.c.l.s4 1934713408
  %v2414 = vunpack.c.0.s8 %v2413
  %v2415 = vlaneseq
  %v2416 = vshrl.u32 %v2415, 7
  %v2417 = vsub.s32 %v2414, %v2416
  %v2418 = vrot.slane %v2410, %v2417
  %v2420 = vunpack.c.l.s4 1934713408
  %v2421 = vunpack.c.0.s8 %v2420
  %v2422 = vlaneseq
  %v2423 = vshrl.u32 %v2422, 7
  %v2424 = vsub.s32 %v2421, %v2423
  %v2425 = vrot.slane %v2411, %v2424
  %v2426 = vcombine.low %v2393, %v2409
  %v2427 = vcombine.high %v2393, %v2409
  %v2429 = vunpack.c.l.s4 1934713408
  %v2430 = vunpack.c.0.s8 %v2429
  %v2431 = vlaneseq
  %v2432 = vshrl.u32 %v2431, 7
  %v2433 = vsub.s32 %v2430, %v2432
  %v2434 = vrot.slane %v2426, %v2433
  %v2436 = vunpack.c.l.s4 1934713408
  %v2437 = vunpack.c.0.s8 %v2436
  %v2438 = vlaneseq
  %v2439 = vshrl.u32 %v2438, 7
  %v2440 = vsub.s32 %v2437, %v2439
  %v2441 = vrot.slane %v2427, %v2440
  %v2442 = vcombine.high %v2418, 0.0
  %v2443 = vcombine.high %v2425, 0.0
  %v2444 = vcombine.high %v2434, 0.0
  %v2445 = vcombine.high %v2441, 0.0
  %v2446 = vcombine.low %v2418, %v2425
  %v2448 = vunpack.c.l.s4 1983009808
  %v2449 = vunpack.c.0.s8 %v2448
  %v2450 = vlaneseq
  %v2451 = vshrl.u32 %v2450, 7
  %v2452 = vsub.s32 %v2449, %v2451
  %v2453 = vrot.slane %v2446, %v2452
  %v2454 = vcombine.low %v2442, %v2443
  %v2456 = vunpack.c.l.s4 1983009808
  %v2457 = vunpack.c.0.s8 %v2456
  %v2458 = vlaneseq
  %v2459 = vshrl.u32 %v2458, 7
  %v2460 = vsub.s32 %v2457, %v2459
  %v2461 = vrot.slane %v2454, %v2460
  %v2462 = vcombine.low %v2434, %v2441
  %v2464 = vunpack.c.l.s4 1983009808
  %v2465 = vunpack.c.0.s8 %v2464
  %v2466 = vlaneseq
  %v2467 = vshrl.u32 %v2466, 7
  %v2468 = vsub.s32 %v2465, %v2467
  %v2469 = vrot.slane %v2462, %v2468
  %v2470 = vcombine.low %v2444, %v2445
  %v2472 = vunpack.c.l.s4 1983009808
  %v2473 = vunpack.c.0.s8 %v2472
  %v2474 = vlaneseq
  %v2475 = vshrl.u32 %v2474, 7
  %v2476 = vsub.s32 %v2473, %v2475
  %v2477 = vrot.slane %v2470, %v2476
  %v2478 = vcombine.low %v2453, %v2461
  %v2479 = vcombine.high %v2453, %v2461
  %v2481 = vunpack.c.l.s4 1934713408
  %v2482 = vunpack.c.0.s8 %v2481
  %v2483 = vlaneseq
  %v2484 = vshrl.u32 %v2483, 7
  %v2485 = vsub.s32 %v2482, %v2484
  %v2486 = vrot.slane %v2478, %v2485
  %v2488 = vunpack.c.l.s4 1934713408
  %v2489 = vunpack.c.0.s8 %v2488
  %v2490 = vlaneseq
  %v2491 = vshrl.u32 %v2490, 7
  %v2492 = vsub.s32 %v2489, %v2491
  %v2493 = vrot.slane %v2479, %v2492
  %v2494 = vcombine.low %v2469, %v2477
  %v2495 = vcombine.high %v2469, %v2477
  %v2497 = vunpack.c.l.s4 1934713408
  %v2498 = vunpack.c.0.s8 %v2497
  %v2499 = vlaneseq
  %v2500 = vshrl.u32 %v2499, 7
  %v2501 = vsub.s32 %v2498, %v2500
  %v2502 = vrot.slane %v2494, %v2501
  %v2504 = vunpack.c.l.s4 1934713408
  %v2505 = vunpack.c.0.s8 %v2504
  %v2506 = vlaneseq
  %v2507 = vshrl.u32 %v2506, 7
  %v2508 = vsub.s32 %v2505, %v2507
  %v2509 = vrot.slane %v2495, %v2508
  %v2510 = vcombine.low %v2486, %v2502
  %v2511 = vcombine.high %v2486, %v2502
  %v2512 = vcombine.low %v2493, %v2509
  %v2513 = vcombine.high %v2493, %v2509
  %2515 = vrot.lane.b32.xlu0 %v2511, 8
  %v2516 = vpop.permute.xlu0 %2515
  %2519 = vrot.lane.b32.xlu0 %v2512, 16
  %v2520 = vpop.permute.xlu0 %2519
  %2523 = vrot.lane.b32.xlu0 %v2513, 24
  %v2524 = vpop.permute.xlu0 %2523
  %v2526 = vsel %vm600, %v2510, %v2516
  %v2527 = vsel %vm1408, %v2526, %v2520
  %v2528 = vsel %vm1410, %v2527, %v2524
  %v2529 = vld [vmem:[%s3] sm:$0xff]
  %v2530 = vld [vmem:[%s3 + $0x8] sm:$0xff]
  %v2531 = vld [vmem:[%s3 + $0x10] sm:$0xff]
  %v2532 = vld [vmem:[%s3 + $0x18] sm:$0xff]
  %v2533 = vlaneseq
  %v2534 = vshrl.u32 %v2533, 7
  %v2535 = vsub.s32 0, %v2534
  %v2536 = vrot.slane %v27, %v2535
  %v2538 = vsel %vm135, %v1411, 0
  %v2541 = vsel %vm135, %v2528, 0
  %2543 = vmatprep.subr.mxu0 0.0
  %2544 = vmatpush1.msra.mxu0 %v2529
  %2545 = vmatprep.subr.mxu0 0.0
  %2546 = vmatpush1.msra.mxu0 %v2530
  %2547 = vmatprep.subr.mxu0 0.0
  %2548 = vmatpush1.msra.mxu0 %v2531
  %2549 = vmatprep.subr.mxu0 0.0
  %2550 = vmatpush1.msra.mxu0 %v2532
  %2551 = vmatprep.subr.mxu0 0.0
  %2552 = vmatpush1.msra.mxu0 0.0
  %2553 = vmatprep.subr.mxu0 0.0
  %2554 = vmatpush1.msra.mxu0 0.0
  %2555 = vmatprep.subr.mxu0 0.0
  %2556 = vmatpush1.msra.mxu0 0.0
  %2557 = vmatprep.subr.mxu0 0.0
  %2558 = vmatpush1.msra.mxu0 0.0
  %2559 = vmatprep.subr.mxu0 0.0
  %2560 = vmatpush1.msra.mxu0 0.0
  %2561 = vmatprep.subr.mxu0 0.0
  %2562 = vmatpush1.msra.mxu0 0.0
  %2563 = vmatprep.subr.mxu0 0.0
  %2564 = vmatpush1.msra.mxu0 0.0
  %2565 = vmatprep.subr.mxu0 0.0
  %2566 = vmatpush1.msra.mxu0 0.0
  %2567 = vmatprep.subr.mxu0 0.0
  %2568 = vmatpush1.msra.mxu0 0.0
  %2569 = vmatprep.subr.mxu0 0.0
  %2570 = vmatpush1.msra.mxu0 0.0
  %2571 = vmatprep.subr.mxu0 0.0
  %2572 = vmatpush1.msra.mxu0 0.0
  %2573 = vmatprep.subr.mxu0 0.0
  %2574 = vmatpush1.msra.mxu0 0.0
  %2575 = vmatprep.subr.mxu0 0.0
  %2576 = vmatpush1.msra.mxu0 0.0
  %2577 = vmatprep.subr.mxu0 0.0
  %2578 = vmatpush1.msra.mxu0 0.0
  %2579 = vmatprep.subr.mxu0 0.0
  %2580 = vmatpush1.msra.mxu0 0.0
  %2581 = vmatprep.subr.mxu0 0.0
  %2582 = vmatpush1.msra.mxu0 0.0
  %2583 = vmatprep.subr.mxu0 0.0
  %2584 = vmatpush1.msra.mxu0 0.0
  %2585 = vmatprep.subr.mxu0 0.0
  %2586 = vmatpush1.msra.mxu0 0.0
  %2587 = vmatprep.subr.mxu0 0.0
  %2588 = vmatpush1.msra.mxu0 0.0
  %2589 = vmatprep.subr.mxu0 0.0
  %2590 = vmatpush1.msra.mxu0 0.0
  %2591 = vmatprep.subr.mxu0 0.0
  %2592 = vmatpush1.msra.mxu0 0.0
  %2593 = vmatprep.subr.mxu0 0.0
  %2594 = vmatpush1.msra.mxu0 0.0
  %2595 = vmatprep.subr.mxu0 0.0
  %2596 = vmatpush1.msra.mxu0 0.0
  %2597 = vmatprep.subr.mxu0 0.0
  %2598 = vmatpush1.msra.mxu0 0.0
  %2599 = vmatprep.subr.mxu0 0.0
  %2600 = vmatpush1.msra.mxu0 0.0
  %2601 = vmatprep.subr.mxu0 0.0
  %2602 = vmatpush1.msra.mxu0 0.0
  %2603 = vmatprep.subr.mxu0 0.0
  %2604 = vmatpush1.msra.mxu0 0.0
  %2605 = vmatprep.subr.mxu0 0.0
  %2606 = vmatpush1.msra.mxu0 0.0
  %2607 = vmatprep.mubr.f32.mxu0 0.0
  %2608 = vmatmul.mubr.f32.gmra.mrb[0].mxu0 %v2538
  %v2609 = vpop.f32.mrb[0].mxu0
  %v2610 = vadd.f32 %v2536, %v2609
  %v2611 = vpop.f32.mrb[0].mxu0
  %2612 = vmatprep.mubr.f32.mxu0 0.0
  %2613 = vmatmul.mubr.f32.gmra.mrb[0].mxu0 %v2541
  %v2614 = vpop.f32.mrb[0].mxu0
  %v2615 = vadd.f32 %v2536, %v2614
  %v2616 = vpop.f32.mrb[0].mxu0
  %2617 = vdwg.mxu0
  %v2618 = vadd.f32 %v2610, %v187
  %v2619 = vadd.f32 %v2615, %v188
  %v2620 = vsel %vm135, %v2618, 0.0
  %2621 = vadd.xlane.f32.xlu0 %v2620
  %v2622 = vpop.xlane.xlu0 %2621
  %v2623 = vsel %vm135, %v2619, 0.0
  %2624 = vadd.xlane.f32.xlu0 %v2623
  %v2625 = vpop.xlane.xlu0 %2624
  %v2626 = vmul.f32 %v2622, %v145
  %v2627 = vmul.f32 %v2625, %v145
  %v2628 = vsub.f32 %v2618, %v2626
  %v2629 = vsub.f32 %v2619, %v2627
  %v2630 = vmul.f32 %v2628, %v2628
  %v2631 = vmul.f32 %v2629, %v2629
  %v2632 = vsel %vm135, %v2630, 0.0
  %2633 = vadd.xlane.f32.xlu0 %v2632
  %v2634 = vpop.xlane.xlu0 %2633
  %v2635 = vsel %vm135, %v2631, 0.0
  %2636 = vadd.xlane.f32.xlu0 %v2635
  %v2637 = vpop.xlane.xlu0 %2636
  %v2638 = vmul.f32 %v2634, %v145
  %v2639 = vmul.f32 %v2637, %v145
  %v2640 = vadd.f32 %v2638, 1e-05
  %v2641 = vadd.f32 %v2639, 1e-05
  %v2642 = vrsqrt.pop %v2640
  %v2643 = vrsqrt.pop %v2641
  %v2644 = vmul.f32 %v2628, %v2642
  %v2645 = vmul.f32 %v2629, %v2643
  %v2646 = vmul.f32 %v2644, %v179
  %v2647 = vmul.f32 %v2645, %v179
  %v2648 = vadd.f32 %v2646, %v186
  %v2649 = vadd.f32 %v2647, %v186
  %v2650 = vlaneseq
  %v2651 = vshrl.u32 %v2650, 7
  %v2652 = vsub.s32 0, %v2651
  %v2653 = vrot.slane %v28, %v2652
  %2658 = vrot.lane.b32.xlu0 %v2529, 96
  %v2659 = vpop.permute.xlu0 %2658
  %2660 = vrot.lane.b32.xlu0 %v2530, 96
  %v2661 = vpop.permute.xlu0 %2660
  %2662 = vrot.lane.b32.xlu0 %v2531, 96
  %v2663 = vpop.permute.xlu0 %2662
  %2664 = vrot.lane.b32.xlu0 %v2532, 96
  %v2665 = vpop.permute.xlu0 %2664
  %v2671 = vsel %vm135, %v2648, 0
  %v2674 = vsel %vm135, %v2649, 0
  %2676 = vmatprep.subr.mxu0 0.0
  %2677 = vmatpush1.msra.mxu0 %v2659
  %2678 = vmatprep.subr.mxu0 0.0
  %2679 = vmatpush1.msra.mxu0 %v2661
  %2680 = vmatprep.subr.mxu0 0.0
  %2681 = vmatpush1.msra.mxu0 %v2663
  %2682 = vmatprep.subr.mxu0 0.0
  %2683 = vmatpush1.msra.mxu0 %v2665
  %2684 = vmatprep.subr.mxu0 0.0
  %2685 = vmatpush1.msra.mxu0 0.0
  %2686 = vmatprep.subr.mxu0 0.0
  %2687 = vmatpush1.msra.mxu0 0.0
  %2688 = vmatprep.subr.mxu0 0.0
  %2689 = vmatpush1.msra.mxu0 0.0
  %2690 = vmatprep.subr.mxu0 0.0
  %2691 = vmatpush1.msra.mxu0 0.0
  %2692 = vmatprep.subr.mxu0 0.0
  %2693 = vmatpush1.msra.mxu0 0.0
  %2694 = vmatprep.subr.mxu0 0.0
  %2695 = vmatpush1.msra.mxu0 0.0
  %2696 = vmatprep.subr.mxu0 0.0
  %2697 = vmatpush1.msra.mxu0 0.0
  %2698 = vmatprep.subr.mxu0 0.0
  %2699 = vmatpush1.msra.mxu0 0.0
  %2700 = vmatprep.subr.mxu0 0.0
  %2701 = vmatpush1.msra.mxu0 0.0
  %2702 = vmatprep.subr.mxu0 0.0
  %2703 = vmatpush1.msra.mxu0 0.0
  %2704 = vmatprep.subr.mxu0 0.0
  %2705 = vmatpush1.msra.mxu0 0.0
  %2706 = vmatprep.subr.mxu0 0.0
  %2707 = vmatpush1.msra.mxu0 0.0
  %2708 = vmatprep.subr.mxu0 0.0
  %2709 = vmatpush1.msra.mxu0 0.0
  %2710 = vmatprep.subr.mxu0 0.0
  %2711 = vmatpush1.msra.mxu0 0.0
  %2712 = vmatprep.subr.mxu0 0.0
  %2713 = vmatpush1.msra.mxu0 0.0
  %2714 = vmatprep.subr.mxu0 0.0
  %2715 = vmatpush1.msra.mxu0 0.0
  %2716 = vmatprep.subr.mxu0 0.0
  %2717 = vmatpush1.msra.mxu0 0.0
  %2718 = vmatprep.subr.mxu0 0.0
  %2719 = vmatpush1.msra.mxu0 0.0
  %2720 = vmatprep.subr.mxu0 0.0
  %2721 = vmatpush1.msra.mxu0 0.0
  %2722 = vmatprep.subr.mxu0 0.0
  %2723 = vmatpush1.msra.mxu0 0.0
  %2724 = vmatprep.subr.mxu0 0.0
  %2725 = vmatpush1.msra.mxu0 0.0
  %2726 = vmatprep.subr.mxu0 0.0
  %2727 = vmatpush1.msra.mxu0 0.0
  %2728 = vmatprep.subr.mxu0 0.0
  %2729 = vmatpush1.msra.mxu0 0.0
  %2730 = vmatprep.subr.mxu0 0.0
  %2731 = vmatpush1.msra.mxu0 0.0
  %2732 = vmatprep.subr.mxu0 0.0
  %2733 = vmatpush1.msra.mxu0 0.0
  %2734 = vmatprep.subr.mxu0 0.0
  %2735 = vmatpush1.msra.mxu0 0.0
  %2736 = vmatprep.subr.mxu0 0.0
  %2737 = vmatpush1.msra.mxu0 0.0
  %2738 = vmatprep.subr.mxu0 0.0
  %2739 = vmatpush1.msra.mxu0 0.0
  %2740 = vmatprep.mubr.f32.mxu0 0.0
  %2741 = vmatmul.mubr.f32.gmra.mrb[0].mxu0 %v2671
  %v2742 = vpop.f32.mrb[0].mxu0
  %v2743 = vadd.f32 %v2653, %v2742
  %v2744 = vpop.f32.mrb[0].mxu0
  %2745 = vmatprep.mubr.f32.mxu0 0.0
  %2746 = vmatmul.mubr.f32.gmra.mrb[0].mxu0 %v2674
  %v2747 = vpop.f32.mrb[0].mxu0
  %v2748 = vadd.f32 %v2653, %v2747
  %v2749 = vpop.f32.mrb[0].mxu0
  %2750 = vdwg.mxu0
  %v2751 = vmul.f32 %v2743, 0.5
  %v2752 = vmul.f32 %v2748, 0.5
  %v2753 = vmul.f32 %v2743, 0.70710677
  %v2754 = vmul.f32 %v2748, 0.70710677
  %vm2755 = vcmp.ge.f32.partialorder %v2753, 0.0
  %vm2756 = vcmp.ge.f32.partialorder %v2754, 0.0
  %v2757 = vsel %vm2755, 1.0, -1.0
  %v2758 = vsel %vm2756, 1.0, -1.0
  %v2759 = vand.u32 2147483647, %v2753
  %v2760 = vand.u32 2147483647, %v2754
  %v2761 = vmul.f32 %v2759, 0.3275911
  %v2762 = vmul.f32 %v2760, 0.3275911
  %v2763 = vadd.f32 %v2761, 1.0
  %v2764 = vadd.f32 %v2762, 1.0
  %v2765 = vrcp.pop %v2763
  %v2766 = vrcp.pop %v2764
  %v2767 = vmul.f32 %v2765, 1.0614054
  %v2768 = vmul.f32 %v2766, 1.0614054
  %v2769 = vadd.f32 %v2767, -1.4531521
  %v2770 = vadd.f32 %v2768, -1.4531521
  %v2771 = vmul.f32 %v2769, %v2765
  %v2772 = vmul.f32 %v2770, %v2766
  %v2773 = vadd.f32 %v2771, 1.4214138
  %v2774 = vadd.f32 %v2772, 1.4214138
  %v2775 = vmul.f32 %v2773, %v2765
  %v2776 = vmul.f32 %v2774, %v2766
  %v2777 = vadd.f32 %v2775, -0.28449672
  %v2778 = vadd.f32 %v2776, -0.28449672
  %v2779 = vmul.f32 %v2777, %v2765
  %v2780 = vmul.f32 %v2778, %v2766
  %v2781 = vadd.f32 %v2779, 0.2548296
  %v2782 = vadd.f32 %v2780, 0.2548296
  %v2783 = vmul.f32 %v2781, %v2765
  %v2784 = vmul.f32 %v2782, %v2766
  %v2785 = vsub.f32 0.0, %v2759
  %v2786 = vsub.f32 0.0, %v2760
  %v2787 = vmul.f32 %v2785, %v2759
  %v2788 = vmul.f32 %v2786, %v2760
  %v2789 = vmul.f32 %v2787, 1.442695
  %v2790 = vpow.pop %v2789
  %v2791 = vmul.f32 %v2788, 1.442695
  %v2792 = vpow.pop %v2791
  %v2793 = vmul.f32 %v2783, %v2790
  %v2794 = vmul.f32 %v2784, %v2792
  %v2795 = vsub.f32 1.0, %v2793
  %v2796 = vsub.f32 1.0, %v2794
  %v2797 = vmul.f32 %v2757, %v2795
  %v2798 = vmul.f32 %v2758, %v2796
  %v2799 = vadd.f32 %v2797, 1.0
  %v2800 = vadd.f32 %v2798, 1.0
  %v2801 = vmul.f32 %v2751, %v2799
  %v2802 = vmul.f32 %v2752, %v2800
  %v2803 = vadd.f32 %v2801, %v2648
  %v2804 = vadd.f32 %v2802, %v2649
  %v2805 = vld [vmem:[%s4] sm:$0xff]
  %v2806 = vld [vmem:[%s4 + $0x8] sm:$0xff]
  %v2807 = vld [vmem:[%s4 + $0x10] sm:$0xff]
  %v2808 = vld [vmem:[%s4 + $0x18] sm:$0xff]
  %v2809 = vlaneseq
  %v2810 = vshrl.u32 %v2809, 7
  %v2811 = vsub.s32 0, %v2810
  %v2812 = vrot.slane %v29, %v2811
  %v2814 = vsel %vm135, %v2803, 0
  %v2817 = vsel %vm135, %v2804, 0
  %2819 = vmatprep.subr.mxu0 0.0
  %2820 = vmatpush1.msra.mxu0 %v2805
  %2821 = vmatprep.subr.mxu0 0.0
  %2822 = vmatpush1.msra.mxu0 %v2806
  %2823 = vmatprep.subr.mxu0 0.0
  %2824 = vmatpush1.msra.mxu0 %v2807
  %2825 = vmatprep.subr.mxu0 0.0
  %2826 = vmatpush1.msra.mxu0 %v2808
  %2827 = vmatprep.subr.mxu0 0.0
  %2828 = vmatpush1.msra.mxu0 0.0
  %2829 = vmatprep.subr.mxu0 0.0
  %2830 = vmatpush1.msra.mxu0 0.0
  %2831 = vmatprep.subr.mxu0 0.0
  %2832 = vmatpush1.msra.mxu0 0.0
  %2833 = vmatprep.subr.mxu0 0.0
  %2834 = vmatpush1.msra.mxu0 0.0
  %2835 = vmatprep.subr.mxu0 0.0
  %2836 = vmatpush1.msra.mxu0 0.0
  %2837 = vmatprep.subr.mxu0 0.0
  %2838 = vmatpush1.msra.mxu0 0.0
  %2839 = vmatprep.subr.mxu0 0.0
  %2840 = vmatpush1.msra.mxu0 0.0
  %2841 = vmatprep.subr.mxu0 0.0
  %2842 = vmatpush1.msra.mxu0 0.0
  %2843 = vmatprep.subr.mxu0 0.0
  %2844 = vmatpush1.msra.mxu0 0.0
  %2845 = vmatprep.subr.mxu0 0.0
  %2846 = vmatpush1.msra.mxu0 0.0
  %2847 = vmatprep.subr.mxu0 0.0
  %2848 = vmatpush1.msra.mxu0 0.0
  %2849 = vmatprep.subr.mxu0 0.0
  %2850 = vmatpush1.msra.mxu0 0.0
  %2851 = vmatprep.subr.mxu0 0.0
  %2852 = vmatpush1.msra.mxu0 0.0
  %2853 = vmatprep.subr.mxu0 0.0
  %2854 = vmatpush1.msra.mxu0 0.0
  %2855 = vmatprep.subr.mxu0 0.0
  %2856 = vmatpush1.msra.mxu0 0.0
  %2857 = vmatprep.subr.mxu0 0.0
  %2858 = vmatpush1.msra.mxu0 0.0
  %2859 = vmatprep.subr.mxu0 0.0
  %2860 = vmatpush1.msra.mxu0 0.0
  %2861 = vmatprep.subr.mxu0 0.0
  %2862 = vmatpush1.msra.mxu0 0.0
  %2863 = vmatprep.subr.mxu0 0.0
  %2864 = vmatpush1.msra.mxu0 0.0
  %2865 = vmatprep.subr.mxu0 0.0
  %2866 = vmatpush1.msra.mxu0 0.0
  %2867 = vmatprep.subr.mxu0 0.0
  %2868 = vmatpush1.msra.mxu0 0.0
  %2869 = vmatprep.subr.mxu0 0.0
  %2870 = vmatpush1.msra.mxu0 0.0
  %2871 = vmatprep.subr.mxu0 0.0
  %2872 = vmatpush1.msra.mxu0 0.0
  %2873 = vmatprep.subr.mxu0 0.0
  %2874 = vmatpush1.msra.mxu0 0.0
  %2875 = vmatprep.subr.mxu0 0.0
  %2876 = vmatpush1.msra.mxu0 0.0
  %2877 = vmatprep.subr.mxu0 0.0
  %2878 = vmatpush1.msra.mxu0 0.0
  %2879 = vmatprep.subr.mxu0 0.0
  %2880 = vmatpush1.msra.mxu0 0.0
  %2881 = vmatprep.subr.mxu0 0.0
  %2882 = vmatpush1.msra.mxu0 0.0
  %2883 = vmatprep.mubr.f32.mxu0 0.0
  %2884 = vmatmul.mubr.f32.gmra.mrb[0].mxu0 %v2814
  %v2885 = vpop.f32.mrb[0].mxu0
  %v2886 = vadd.f32 %v2812, %v2885
  %v2887 = vpop.f32.mrb[0].mxu0
  %2888 = vmatprep.mubr.f32.mxu0 0.0
  %2889 = vmatmul.mubr.f32.gmra.mrb[0].mxu0 %v2817
  %v2890 = vpop.f32.mrb[0].mxu0
  %v2891 = vadd.f32 %v2812, %v2890
  %v2892 = vpop.f32.mrb[0].mxu0
  %2893 = vdwg.mxu0
  %2894 = vst [vmem:[%s6] sm:$0xff] %v2886
  %2895 = vst [vmem:[%s6 + $0x8] sm:$0xff] %v2891
  // Predicated region
  $region26: #{_device_forward.1} parent=0 // pred_check
    _
  $region27: #{_device_forward.1} parent=0 // pred_check_branch
    %2897 = sbr.rel (0) target = $region29
  $region28: #{_device_forward.1} parent=0 // pred_region
    _
  $region29: #{_device_forward.1} parent=0 // pred_fallthru
    _
  // Predicated region
  $region30: #{_device_forward.1} parent=0 // pred_check
    _
  $region31: #{_device_forward.1} parent=0 // pred_check_branch
    %2899 = sbr.rel (0) target = $region33
  $region32: #{_device_forward.1} parent=0 // pred_region
    _
  $region33: #{_device_forward.1} parent=0 // pred_fallthru
    _

</llo_original>
